<compile_context>
chip_gen: v6e
topology: v6e:2x2x1
jax: 0.10.0
libtpu: 0.0.40
codegen_flags: <defaults>
</compile_context>

<pallas_src>
import functools

import jax
import jax.numpy as jnp
from jax import lax
from jax.experimental import pallas as pl
from jax.experimental.pallas import tpu as pltpu


def _round_up(x, m):
    return ((x + m - 1) // m) * m


def _pad_axis(a, axis, new_size):
    if a.shape[axis] == new_size:
        return a
    widths = [(0, 0)] * a.ndim
    widths[axis] = (0, new_size - a.shape[axis])
    return jnp.pad(a, widths)


# ---------------------------------------------------------------------------
# Kernel 1: big parallel input projection  x @ [Wxr | Wxz | Wxh] + b
# ---------------------------------------------------------------------------
def gru_input_proj_kernel(x_ref, w_ref, b_ref, xrz_ref, xh_ref, *, hidden_pad):
    p = jnp.dot(x_ref[...], w_ref[...], preferred_element_type=jnp.float32) + b_ref[...]
    xrz_ref[...] = p[:, : 2 * hidden_pad]
    xh_ref[...] = p[:, 2 * hidden_pad:]


def gru_input_projection(x_pad, wx_all, b_all, hidden_pad):
    """x_pad: (T_pad, Bp, C_in) -> (xrz (T_pad,Bp,2Hp), xh (T_pad,Bp,Hp))."""
    T_pad, Bp, C_in = x_pad.shape
    Hp = hidden_pad
    rows = T_pad * Bp                       # multiple of 8 (Bp is)
    row_block = rows if rows <= 1024 else 1024
    rows_pad = _round_up(rows, row_block)
    x_flat = x_pad.reshape(rows, C_in)
    if rows_pad != rows:
        x_flat = jnp.pad(x_flat, ((0, rows_pad - rows), (0, 0)))

    xrz, xh = pl.pallas_call(
        functools.partial(gru_input_proj_kernel, hidden_pad=Hp),
        out_shape=(jax.ShapeDtypeStruct((rows_pad, 2 * Hp), jnp.float32),
                   jax.ShapeDtypeStruct((rows_pad, Hp), jnp.float32)),
        grid_spec=pltpu.PrefetchScalarGridSpec(
            num_scalar_prefetch=0,
            grid=(rows_pad // row_block,),
            in_specs=[pl.BlockSpec((row_block, C_in), lambda i: (i, 0)),
                      pl.BlockSpec((C_in, 3 * Hp), lambda i: (0, 0)),
                      pl.BlockSpec((1, 3 * Hp), lambda i: (0, 0))],
            out_specs=[pl.BlockSpec((row_block, 2 * Hp), lambda i: (i, 0)),
                       pl.BlockSpec((row_block, Hp), lambda i: (i, 0))],
        ),
        compiler_params=pltpu.CompilerParams(dimension_semantics=("parallel",)),
    )(x_flat, wx_all, b_all)

    xrz = xrz[:rows].reshape(T_pad, Bp, 2 * Hp)
    xh = xh[:rows].reshape(T_pad, Bp, Hp)
    return xrz, xh


# ---------------------------------------------------------------------------
# Kernel 2: sequential recurrence over time chunks (h carried in VMEM scratch)
# ---------------------------------------------------------------------------
def gru_recurrent_kernel(xrz_ref, xh_ref, h0_ref, whrz_ref, whh_ref,
                         out_ref, hT_ref, h_acc,
                         *, seq_len, time_chunk, hidden_pad):
    c = pl.program_id(1)                    # time-chunk index (sequential / "arbitrary")

    @pl.when(c == 0)
    def _():
        h_acc[...] = h0_ref[...]            # (re)load h0 at the start of each batch block

    whrz = whrz_ref[...]                    # (Hp, 2Hp)  fused [Whr | Whz]
    whh = whh_ref[...]                      # (Hp, Hp)
    Hp = hidden_pad
    t0 = c * time_chunk

    def step(i, h):
        # gates: biases already folded into the precomputed projections
        gates = jax.nn.sigmoid(
            xrz_ref[i] + jnp.dot(h, whrz, preferred_element_type=jnp.float32))
        r = gates[:, :Hp]
        z = gates[:, Hp:]
        # candidate: reset gate applied to h BEFORE the matmul (matches the spec module)
        cand = jnp.tanh(
            xh_ref[i] + jnp.dot(h * r, whh, preferred_element_type=jnp.float32))
        h_new = z * h + (1.0 - z) * cand
        # Guard padded time steps so the carried hidden state stays exact.
        h_new = jnp.where(t0 + i < seq_len, h_new, h)
        out_ref[i] = h_new
        return h_new

    unroll = True if time_chunk <= 16 else 8
    h_final = lax.fori_loop(0, time_chunk, step, h_acc[...], unroll=unroll)
    h_acc[...] = h_final

    @pl.when(c == pl.num_programs(1) - 1)
    def _():
        hT_ref[...] = h_final               # written once per batch block, not every step


def gru_layer_recurrent(xrz, xh, h0_pad, wh_rz, wh_h,
                        *, seq_len, hidden_pad, time_chunk, batch_block=None):
    T_pad, Bp, _ = xrz.shape
    Hp = hidden_pad
    Bb = Bp if batch_block is None else batch_block
    assert Bp % Bb == 0 and Bb % 8 == 0

    kernel = functools.partial(gru_recurrent_kernel, seq_len=seq_len,
                               time_chunk=time_chunk, hidden_pad=Hp)
    out, hT = pl.pallas_call(
        kernel,
        out_shape=(jax.ShapeDtypeStruct((T_pad, Bp, Hp), jnp.float32),
                   jax.ShapeDtypeStruct((Bp, Hp), jnp.float32)),
        grid_spec=pltpu.PrefetchScalarGridSpec(
            num_scalar_prefetch=0,
            grid=(Bp // Bb, T_pad // time_chunk),
            in_specs=[
                pl.BlockSpec((time_chunk, Bb, 2 * Hp), lambda b, c: (c, b, 0)),
                pl.BlockSpec((time_chunk, Bb, Hp), lambda b, c: (c, b, 0)),
                pl.BlockSpec((Bb, Hp), lambda b, c: (b, 0)),
                pl.BlockSpec((Hp, 2 * Hp), lambda b, c: (0, 0)),
                pl.BlockSpec((Hp, Hp), lambda b, c: (0, 0)),
            ],
            out_specs=[
                pl.BlockSpec((time_chunk, Bb, Hp), lambda b, c: (c, b, 0)),
                pl.BlockSpec((Bb, Hp), lambda b, c: (b, 0)),
            ],
            scratch_shapes=[pltpu.VMEM((Bb, Hp), jnp.float32)],
        ),
        compiler_params=pltpu.CompilerParams(
            # batch axis is parallel (megacore on v7x); the recurrence axis is sequential.
            dimension_semantics=("parallel", "arbitrary")),
    )(xrz, xh, h0_pad, wh_rz, wh_h)
    return out, hT


# ---------------------------------------------------------------------------
# Parameter handling
# ---------------------------------------------------------------------------
def init_gru_params(key, input_size, hidden_size, num_layers):
    """U(-sqrt(k), sqrt(k)) with k = 1/hidden_size, weights stored as (in, out)."""
    bound = float((1.0 / hidden_size) ** 0.5)
    layers = []
    for ly in range(num_layers):
        c_in = input_size if ly == 0 else hidden_size
        shapes = [
            (c_in, 2 * hidden_size),          # W_x_rz
            (hidden_size, 2 * hidden_size),   # W_h_rz
            (c_in, hidden_size),              # W_x_h
            (hidden_size, hidden_size),       # W_h_h
            (2 * hidden_size,),               # b_x_rz
            (2 * hidden_size,),               # b_h_rz
            (hidden_size,),                   # b_x_h
            (hidden_size,),                   # b_h_h
        ]
        params = []
        for shp in shapes:
            key, sub = jax.random.split(key)
            params.append(jax.random.uniform(sub, shp, jnp.float32, -bound, bound))
        layers.append(tuple(params))
    return layers


def pack_layer_params(params, hidden_size, hidden_pad, in_pad=None):
    """Pad H->Hp, fuse [Wxr|Wxz|Wxh] for the projection, fuse [Whr|Whz] for the recurrence,
    and fold the hidden-side biases into the projection bias."""
    wx_rz, wh_rz, wx_h, wh_h, bx_rz, bh_rz, bx_h, bh_h = params
    H, Hp = hidden_size, hidden_pad
    wxr, wxz = wx_rz[:, :H], wx_rz[:, H:]
    whr, whz = wh_rz[:, :H], wh_rz[:, H:]
    bxr, bxz = bx_rz[:H], bx_rz[H:]
    bhr, bhz = bh_rz[:H], bh_rz[H:]

    padc = lambda w: _pad_axis(w, 1, Hp)
    padv = lambda b: _pad_axis(b, 0, Hp)

    wx_all = jnp.concatenate([padc(wxr), padc(wxz), padc(wx_h)], axis=1)       # (C_in, 3Hp)
    b_all = jnp.concatenate([padv(bxr + bhr), padv(bxz + bhz),
                             padv(bx_h + bh_h)])[None, :]                       # (1, 3Hp)
    if in_pad is not None:                    # layers >= 1 consume Hp-wide padded activations
        wx_all = _pad_axis(wx_all, 0, in_pad)

    wh_rz_p = _pad_axis(jnp.concatenate([padc(whr), padc(whz)], axis=1), 0, Hp)  # (Hp, 2Hp)
    wh_h_p = _pad_axis(padc(wh_h), 0, Hp)                                        # (Hp, Hp)
    return wx_all, b_all, wh_rz_p, wh_h_p


# ---------------------------------------------------------------------------
# Full multi-layer forward
# ---------------------------------------------------------------------------
def gru_forward(x, layer_params, h0=None, *, time_chunk=64, batch_block=None):
    """x: (T, B, input_size) -> (output (T,B,H), h_n (L,B,H))."""
    T, B, _ = x.shape
    L = len(layer_params)
    H = layer_params[0][3].shape[0]           # W_h_h is (H, H)
    Hp = _round_up(H, 128)                    # lane-dense hidden width
    Bp = _round_up(B, 8)                      # sublane-aligned batch
    tc = max(1, min(time_chunk, T))
    T_pad = _round_up(T, tc)

    if h0 is None:
        h0 = jnp.zeros((L, B, H), jnp.float32)

    x_pad = jnp.zeros((T_pad, Bp, x.shape[-1]), jnp.float32).at[:T, :B, :].set(x)
    h0_pad = jnp.zeros((L, Bp, Hp), jnp.float32).at[:, :B, :H].set(h0)

    # TODO(synk): for many layers all weights could be fused into a single pallas_call
    # (layer loop inside the time chunk) to avoid HBM round-trips of intermediates.
    layer_in = x_pad
    finals = []
    for ly in range(L):
        packed = pack_layer_params(layer_params[ly], H, Hp,
                                   in_pad=None if ly == 0 else Hp)
        wx_all, b_all, wh_rz_p, wh_h_p = packed
        xrz, xh = gru_input_projection(layer_in, wx_all, b_all, Hp)
        layer_in, hT = gru_layer_recurrent(
            xrz, xh, h0_pad[ly], wh_rz_p, wh_h_p,
            seq_len=T, hidden_pad=Hp, time_chunk=tc, batch_block=batch_block)
        finals.append(hT)

    out = layer_in[:T, :B, :H]
    h_n = jnp.stack(finals, axis=0)[:, :B, :H]
    return out, h_n


# ---------------------------------------------------------------------------
# Pure-JAX reference mirroring the PyTorch module loop
# ---------------------------------------------------------------------------
def gru_reference(x, layer_params, h0=None):
    T, B, _ = x.shape
    L = len(layer_params)
    H = layer_params[0][3].shape[0]
    if h0 is None:
        h0 = jnp.zeros((L, B, H), jnp.float32)
    hs = [h0[ly] for ly in range(L)]
    outputs = []
    for t in range(T):
        inp = x[t]
        for ly in range(L):
            wx_rz, wh_rz, wx_h, wh_h, bx_rz, bh_rz, bx_h, bh_h = layer_params[ly]
            h = hs[ly]
            rz = inp @ wx_rz + bx_rz + h @ wh_rz + bh_rz
            r = jax.nn.sigmoid(rz[:, :H])
            z = jax.nn.sigmoid(rz[:, H:])
            cand = jnp.tanh(inp @ wx_h + bx_h + (h * r) @ wh_h + bh_h)
            h_new = z * h + (1.0 - z) * cand
            hs[ly] = h_new
            inp = h_new
        outputs.append(inp)
    return jnp.stack(outputs, axis=0), jnp.stack(hs, axis=0)


if __name__ == "__main__":
    T, B = 8, 4
    input_size, hidden_size, num_layers = 16, 32, 2

    key = jax.random.PRNGKey(0)
    kx, kp = jax.random.split(key)
    x = jax.random.normal(kx, (T, B, input_size), jnp.float32)
    params = init_gru_params(kp, input_size, hidden_size, num_layers)

    fwd = jax.jit(gru_forward)
    out, h_n = fwd(x, params)
    out = jax.block_until_ready(out)
    h_n = jax.block_until_ready(h_n)

    ref_out, ref_h = gru_reference(x, params)
    assert out.shape == (T, B, hidden_size)
    assert h_n.shape == (num_layers, B, hidden_size)
    assert jnp.allclose(out, ref_out, atol=2e-3, rtol=2e-3)
    assert jnp.allclose(h_n, ref_h, atol=2e-3, rtol=2e-3)

    print("KERNEL_OK")
</pallas_src>

<mosaic_0001>
module attributes {stable_mosaic.version = 11 : i64} {
  func.func @gru_input_proj_kernel(%arg0: i32, %arg1: memref<64x16xf32, #tpu.memory_space<vmem>>, %arg2: memref<16x384xf32, #tpu.memory_space<vmem>>, %arg3: memref<1x384xf32, #tpu.memory_space<vmem>>, %arg4: memref<64x256xf32, #tpu.memory_space<vmem>>, %arg5: memref<64x128xf32, #tpu.memory_space<vmem>>) attributes {dimension_semantics = [#tpu.dimension_semantics<parallel>], iteration_bounds = array<i64: 1>, scalar_prefetch = 0 : i64, scratch_operands = 0 : i64, tpu.core_type = #tpu.core_type<tc>, window_params = [{transform_indices = @transform_0, window_bounds = array<i64: 64, 16>}, {pipeline_mode = #tpu.pipeline_mode<synchronous>, transform_indices = @transform_1, window_bounds = array<i64: 16, 384>}, {pipeline_mode = #tpu.pipeline_mode<synchronous>, transform_indices = @transform_2, window_bounds = array<i64: 1, 384>}, {transform_indices = @transform_3, window_bounds = array<i64: 64, 256>}, {transform_indices = @transform_4, window_bounds = array<i64: 64, 128>}]} {
    %c0 = arith.constant 0 : index
    %c0_0 = arith.constant 0 : index
    %0 = vector.load %arg1[%c0, %c0_0] : memref<64x16xf32, #tpu.memory_space<vmem>>, vector<64x16xf32>
    %c0_1 = arith.constant 0 : index
    %c0_2 = arith.constant 0 : index
    %1 = vector.load %arg2[%c0_1, %c0_2] : memref<16x384xf32, #tpu.memory_space<vmem>>, vector<16x384xf32>
    %cst = arith.constant dense<0.000000e+00> : vector<64x384xf32>
    %2 = tpu.matmul %0, %1, %cst {dimension_numbers = #tpu.dot_dimension_numbers<[1], [0], [0], [1], [0, 0, 1, 1], [], []>} : vector<64x16xf32>, vector<16x384xf32>, vector<64x384xf32> -> vector<64x384xf32>
    %c0_3 = arith.constant 0 : index
    %c0_4 = arith.constant 0 : index
    %3 = vector.load %arg3[%c0_3, %c0_4] : memref<1x384xf32, #tpu.memory_space<vmem>>, vector<1x384xf32>
    %4 = vector.broadcast %3 : vector<1x384xf32> to vector<64x384xf32>
    %5 = arith.addf %2, %4 : vector<64x384xf32>
    %6 = vector.extract_strided_slice %5 {offsets = [0, 0], sizes = [64, 256], strides = [1, 1]} : vector<64x384xf32> to vector<64x256xf32>
    %c0_5 = arith.constant 0 : index
    %c0_6 = arith.constant 0 : index
    %7 = vector.load %arg4[%c0_5, %c0_6] : memref<64x256xf32, #tpu.memory_space<vmem>>, vector<64x256xf32>
    tpu.vector_store %arg4[%c0_5, %c0_6], %6 {strides = array<i32>} : memref<64x256xf32, #tpu.memory_space<vmem>>, vector<64x256xf32>,
    %8 = vector.extract_strided_slice %5 {offsets = [0, 256], sizes = [64, 128], strides = [1, 1]} : vector<64x384xf32> to vector<64x128xf32>
    %c0_7 = arith.constant 0 : index
    %c0_8 = arith.constant 0 : index
    %9 = vector.load %arg5[%c0_7, %c0_8] : memref<64x128xf32, #tpu.memory_space<vmem>>, vector<64x128xf32>
    tpu.vector_store %arg5[%c0_7, %c0_8], %8 {strides = array<i32>} : memref<64x128xf32, #tpu.memory_space<vmem>>, vector<64x128xf32>,
    return
  }
  func.func @transform_0(%arg0: i32) -> (i32, i32) {
    %c0_i32 = arith.constant 0 : i32
    %c0_i32_0 = arith.constant 0 : i32
    return %arg0, %c0_i32 : i32, i32
  }
  func.func @transform_1(%arg0: i32) -> (i32, i32) {
    %c0_i32 = arith.constant 0 : i32
    %c0_i32_0 = arith.constant 0 : i32
    %c0_i32_1 = arith.constant 0 : i32
    return %c0_i32, %c0_i32_0 : i32, i32
  }
  func.func @transform_2(%arg0: i32) -> (i32, i32) {
    %c0_i32 = arith.constant 0 : i32
    %c0_i32_0 = arith.constant 0 : i32
    %c0_i32_1 = arith.constant 0 : i32
    return %c0_i32, %c0_i32_0 : i32, i32
  }
  func.func @transform_3(%arg0: i32) -> (i32, i32) {
    %c0_i32 = arith.constant 0 : i32
    %c0_i32_0 = arith.constant 0 : i32
    return %arg0, %c0_i32 : i32, i32
  }
  func.func @transform_4(%arg0: i32) -> (i32, i32) {
    %c0_i32 = arith.constant 0 : i32
    %c0_i32_0 = arith.constant 0 : i32
    return %arg0, %c0_i32 : i32, i32
  }
}

module attributes {stable_mosaic.version = 11 : i64} {
  func.func @gru_input_proj_kernel(%arg0: i32, %arg1: memref<64x128xf32, #tpu.memory_space<vmem>>, %arg2: memref<128x384xf32, #tpu.memory_space<vmem>>, %arg3: memref<1x384xf32, #tpu.memory_space<vmem>>, %arg4: memref<64x256xf32, #tpu.memory_space<vmem>>, %arg5: memref<64x128xf32, #tpu.memory_space<vmem>>) attributes {dimension_semantics = [#tpu.dimension_semantics<parallel>], iteration_bounds = array<i64: 1>, scalar_prefetch = 0 : i64, scratch_operands = 0 : i64, tpu.core_type = #tpu.core_type<tc>, window_params = [{transform_indices = @transform_0, window_bounds = array<i64: 64, 128>}, {pipeline_mode = #tpu.pipeline_mode<synchronous>, transform_indices = @transform_1, window_bounds = array<i64: 128, 384>}, {pipeline_mode = #tpu.pipeline_mode<synchronous>, transform_indices = @transform_2, window_bounds = array<i64: 1, 384>}, {transform_indices = @transform_3, window_bounds = array<i64: 64, 256>}, {transform_indices = @transform_4, window_bounds = array<i64: 64, 128>}]} {
    %c0 = arith.constant 0 : index
    %c0_0 = arith.constant 0 : index
    %0 = vector.load %arg1[%c0, %c0_0] : memref<64x128xf32, #tpu.memory_space<vmem>>, vector<64x128xf32>
    %c0_1 = arith.constant 0 : index
    %c0_2 = arith.constant 0 : index
    %1 = vector.load %arg2[%c0_1, %c0_2] : memref<128x384xf32, #tpu.memory_space<vmem>>, vector<128x384xf32>
    %cst = arith.constant dense<0.000000e+00> : vector<64x384xf32>
    %2 = tpu.matmul %0, %1, %cst {dimension_numbers = #tpu.dot_dimension_numbers<[1], [0], [0], [1], [0, 0, 1, 1], [], []>} : vector<64x128xf32>, vector<128x384xf32>, vector<64x384xf32> -> vector<64x384xf32>
    %c0_3 = arith.constant 0 : index
    %c0_4 = arith.constant 0 : index
    %3 = vector.load %arg3[%c0_3, %c0_4] : memref<1x384xf32, #tpu.memory_space<vmem>>, vector<1x384xf32>
    %4 = vector.broadcast %3 : vector<1x384xf32> to vector<64x384xf32>
    %5 = arith.addf %2, %4 : vector<64x384xf32>
    %6 = vector.extract_strided_slice %5 {offsets = [0, 0], sizes = [64, 256], strides = [1, 1]} : vector<64x384xf32> to vector<64x256xf32>
    %c0_5 = arith.constant 0 : index
    %c0_6 = arith.constant 0 : index
    %7 = vector.load %arg4[%c0_5, %c0_6] : memref<64x256xf32, #tpu.memory_space<vmem>>, vector<64x256xf32>
    tpu.vector_store %arg4[%c0_5, %c0_6], %6 {strides = array<i32>} : memref<64x256xf32, #tpu.memory_space<vmem>>, vector<64x256xf32>,
    %8 = vector.extract_strided_slice %5 {offsets = [0, 256], sizes = [64, 128], strides = [1, 1]} : vector<64x384xf32> to vector<64x128xf32>
    %c0_7 = arith.constant 0 : index
    %c0_8 = arith.constant 0 : index
    %9 = vector.load %arg5[%c0_7, %c0_8] : memref<64x128xf32, #tpu.memory_space<vmem>>, vector<64x128xf32>
    tpu.vector_store %arg5[%c0_7, %c0_8], %8 {strides = array<i32>} : memref<64x128xf32, #tpu.memory_space<vmem>>, vector<64x128xf32>,
    return
  }
  func.func @transform_0(%arg0: i32) -> (i32, i32) {
    %c0_i32 = arith.constant 0 : i32
    %c0_i32_0 = arith.constant 0 : i32
    return %arg0, %c0_i32 : i32, i32
  }
  func.func @transform_1(%arg0: i32) -> (i32, i32) {
    %c0_i32 = arith.constant 0 : i32
    %c0_i32_0 = arith.constant 0 : i32
    %c0_i32_1 = arith.constant 0 : i32
    return %c0_i32, %c0_i32_0 : i32, i32
  }
  func.func @transform_2(%arg0: i32) -> (i32, i32) {
    %c0_i32 = arith.constant 0 : i32
    %c0_i32_0 = arith.constant 0 : i32
    %c0_i32_1 = arith.constant 0 : i32
    return %c0_i32, %c0_i32_0 : i32, i32
  }
  func.func @transform_3(%arg0: i32) -> (i32, i32) {
    %c0_i32 = arith.constant 0 : i32
    %c0_i32_0 = arith.constant 0 : i32
    return %arg0, %c0_i32 : i32, i32
  }
  func.func @transform_4(%arg0: i32) -> (i32, i32) {
    %c0_i32 = arith.constant 0 : i32
    %c0_i32_0 = arith.constant 0 : i32
    return %arg0, %c0_i32 : i32, i32
  }
}

module attributes {stable_mosaic.version = 11 : i64} {
  func.func @gru_recurrent_kernel(%arg0: i32, %arg1: i32, %arg2: memref<8x8x256xf32, #tpu.memory_space<vmem>>, %arg3: memref<8x8x128xf32, #tpu.memory_space<vmem>>, %arg4: memref<8x128xf32, #tpu.memory_space<vmem>>, %arg5: memref<128x256xf32, #tpu.memory_space<vmem>>, %arg6: memref<128x128xf32, #tpu.memory_space<vmem>>, %arg7: memref<8x8x128xf32, #tpu.memory_space<vmem>>, %arg8: memref<8x128xf32, #tpu.memory_space<vmem>>, %arg9: memref<8x128xf32, #tpu.memory_space<vmem>>) attributes {dimension_semantics = [#tpu.dimension_semantics<parallel>, #tpu.dimension_semantics<arbitrary>], iteration_bounds = array<i64: 1, 1>, scalar_prefetch = 0 : i64, scratch_operands = 1 : i64, tpu.core_type = #tpu.core_type<tc>, window_params = [{transform_indices = @transform_0, window_bounds = array<i64: 8, 8, 256>}, {transform_indices = @transform_1, window_bounds = array<i64: 8, 8, 128>}, {transform_indices = @transform_2, window_bounds = array<i64: 8, 128>}, {pipeline_mode = #tpu.pipeline_mode<synchronous>, transform_indices = @transform_3, window_bounds = array<i64: 128, 256>}, {pipeline_mode = #tpu.pipeline_mode<synchronous>, transform_indices = @transform_4, window_bounds = array<i64: 128, 128>}, {transform_indices = @transform_5, window_bounds = array<i64: 8, 8, 128>}, {transform_indices = @transform_6, window_bounds = array<i64: 8, 128>}]} {
    %c0_i32 = arith.constant 0 : i32
    %0 = arith.cmpi eq, %arg1, %c0_i32 : i32
    %1 = arith.extui %0 : i1 to i32
    %c0_i32_0 = arith.constant 0 : i32
    %2 = arith.cmpi ne, %1, %c0_i32_0 : i32
    scf.if %2 {
      %c0_99 = arith.constant 0 : index
      %c0_100 = arith.constant 0 : index
      %259 = vector.load %arg4[%c0_99, %c0_100] : memref<8x128xf32, #tpu.memory_space<vmem>>, vector<8x128xf32>
      %c0_101 = arith.constant 0 : index
      %c0_102 = arith.constant 0 : index
      %260 = vector.load %arg9[%c0_101, %c0_102] : memref<8x128xf32, #tpu.memory_space<vmem>>, vector<8x128xf32>
      tpu.vector_store %arg9[%c0_101, %c0_102], %259 {strides = array<i32>} : memref<8x128xf32, #tpu.memory_space<vmem>>, vector<8x128xf32>,
    } else {
    }
    %c0 = arith.constant 0 : index
    %c0_1 = arith.constant 0 : index
    %3 = vector.load %arg5[%c0, %c0_1] : memref<128x256xf32, #tpu.memory_space<vmem>>, vector<128x256xf32>
    %c0_2 = arith.constant 0 : index
    %c0_3 = arith.constant 0 : index
    %4 = vector.load %arg6[%c0_2, %c0_3] : memref<128x128xf32, #tpu.memory_space<vmem>>, vector<128x128xf32>
    %c8_i32 = arith.constant 8 : i32
    %5 = arith.muli %arg1, %c8_i32 : i32
    %c0_4 = arith.constant 0 : index
    %c0_5 = arith.constant 0 : index
    %6 = vector.load %arg9[%c0_4, %c0_5] : memref<8x128xf32, #tpu.memory_space<vmem>>, vector<8x128xf32>
    %c0_i32_6 = arith.constant 0 : i32
    %7 = arith.index_cast %c0_i32_6 : i32 to index
    %c0_7 = arith.constant 0 : index
    %c0_8 = arith.constant 0 : index
    %8 = vector.load %arg2[%7, %c0_7, %c0_8] : memref<8x8x256xf32, #tpu.memory_space<vmem>>, vector<1x8x256xf32>
    %9 = vector.shape_cast %8 : vector<1x8x256xf32> to vector<8x256xf32>
    %cst = arith.constant dense<0.000000e+00> : vector<8x256xf32>
    %10 = tpu.matmul %6, %3, %cst {dimension_numbers = #tpu.dot_dimension_numbers<[1], [0], [0], [1], [0, 0, 1, 1], [], []>} : vector<8x128xf32>, vector<128x256xf32>, vector<8x256xf32> -> vector<8x256xf32>
    %11 = arith.addf %9, %10 : vector<8x256xf32>
    %12 = arith.negf %11 : vector<8x256xf32>
    %13 = math.exp %12 : vector<8x256xf32>
    %cst_9 = arith.constant 1.000000e+00 : f32
    %14 = vector.broadcast %cst_9 : f32 to vector<8x256xf32>
    %15 = arith.addf %14, %13 : vector<8x256xf32>
    %16 = arith.divf %14, %15 : vector<8x256xf32>
    %17 = vector.extract_strided_slice %16 {offsets = [0, 0], sizes = [8, 128], strides = [1, 1]} : vector<8x256xf32> to vector<8x128xf32>
    %18 = vector.extract_strided_slice %16 {offsets = [0, 128], sizes = [8, 128], strides = [1, 1]} : vector<8x256xf32> to vector<8x128xf32>
    %19 = arith.index_cast %c0_i32_6 : i32 to index
    %c0_10 = arith.constant 0 : index
    %c0_11 = arith.constant 0 : index
    %20 = vector.load %arg3[%19, %c0_10, %c0_11] : memref<8x8x128xf32, #tpu.memory_space<vmem>>, vector<1x8x128xf32>
    %21 = vector.shape_cast %20 : vector<1x8x128xf32> to vector<8x128xf32>
    %22 = arith.mulf %6, %17 : vector<8x128xf32>
    %cst_12 = arith.constant dense<0.000000e+00> : vector<8x128xf32>
    %23 = tpu.matmul %22, %4, %cst_12 {dimension_numbers = #tpu.dot_dimension_numbers<[1], [0], [0], [1], [0, 0, 1, 1], [], []>} : vector<8x128xf32>, vector<128x128xf32>, vector<8x128xf32> -> vector<8x128xf32>
    %24 = arith.addf %21, %23 : vector<8x128xf32>
    %25 = math.tanh %24 : vector<8x128xf32>
    %26 = arith.mulf %18, %6 : vector<8x128xf32>
    %cst_13 = arith.constant 1.000000e+00 : f32
    %27 = vector.broadcast %cst_13 : f32 to vector<8x128xf32>
    %28 = arith.subf %27, %18 : vector<8x128xf32>
    %29 = arith.mulf %28, %25 : vector<8x128xf32>
    %30 = arith.addf %26, %29 : vector<8x128xf32>
    %31 = arith.addi %5, %c0_i32_6 : i32
    %c8_i32_14 = arith.constant 8 : i32
    %32 = arith.cmpi slt, %31, %c8_i32_14 : i32
    %33 = arith.select %32, %30, %6 : vector<8x128xf32>
    %34 = arith.index_cast %c0_i32_6 : i32 to index
    %c0_15 = arith.constant 0 : index
    %c0_16 = arith.constant 0 : index
    %35 = vector.load %arg7[%34, %c0_15, %c0_16] : memref<8x8x128xf32, #tpu.memory_space<vmem>>, vector<1x8x128xf32>
    %36 = vector.shape_cast %35 : vector<1x8x128xf32> to vector<8x128xf32>
    %37 = vector.shape_cast %33 : vector<8x128xf32> to vector<1x8x128xf32>
    tpu.vector_store %arg7[%34, %c0_15, %c0_16], %37 {strides = array<i32>} : memref<8x8x128xf32, #tpu.memory_space<vmem>>, vector<1x8x128xf32>,
    %c1_i32 = arith.constant 1 : i32
    %38 = arith.index_cast %c1_i32 : i32 to index
    %c0_17 = arith.constant 0 : index
    %c0_18 = arith.constant 0 : index
    %39 = vector.load %arg2[%38, %c0_17, %c0_18] : memref<8x8x256xf32, #tpu.memory_space<vmem>>, vector<1x8x256xf32>
    %40 = vector.shape_cast %39 : vector<1x8x256xf32> to vector<8x256xf32>
    %cst_19 = arith.constant dense<0.000000e+00> : vector<8x256xf32>
    %41 = tpu.matmul %33, %3, %cst_19 {dimension_numbers = #tpu.dot_dimension_numbers<[1], [0], [0], [1], [0, 0, 1, 1], [], []>} : vector<8x128xf32>, vector<128x256xf32>, vector<8x256xf32> -> vector<8x256xf32>
    %42 = arith.addf %40, %41 : vector<8x256xf32>
    %43 = arith.negf %42 : vector<8x256xf32>
    %44 = math.exp %43 : vector<8x256xf32>
    %cst_20 = arith.constant 1.000000e+00 : f32
    %45 = vector.broadcast %cst_20 : f32 to vector<8x256xf32>
    %46 = arith.addf %45, %44 : vector<8x256xf32>
    %47 = arith.divf %45, %46 : vector<8x256xf32>
    %48 = vector.extract_strided_slice %47 {offsets = [0, 0], sizes = [8, 128], strides = [1, 1]} : vector<8x256xf32> to vector<8x128xf32>
    %49 = vector.extract_strided_slice %47 {offsets = [0, 128], sizes = [8, 128], strides = [1, 1]} : vector<8x256xf32> to vector<8x128xf32>
    %50 = arith.index_cast %c1_i32 : i32 to index
    %c0_21 = arith.constant 0 : index
    %c0_22 = arith.constant 0 : index
    %51 = vector.load %arg3[%50, %c0_21, %c0_22] : memref<8x8x128xf32, #tpu.memory_space<vmem>>, vector<1x8x128xf32>
    %52 = vector.shape_cast %51 : vector<1x8x128xf32> to vector<8x128xf32>
    %53 = arith.mulf %33, %48 : vector<8x128xf32>
    %cst_23 = arith.constant dense<0.000000e+00> : vector<8x128xf32>
    %54 = tpu.matmul %53, %4, %cst_23 {dimension_numbers = #tpu.dot_dimension_numbers<[1], [0], [0], [1], [0, 0, 1, 1], [], []>} : vector<8x128xf32>, vector<128x128xf32>, vector<8x128xf32> -> vector<8x128xf32>
    %55 = arith.addf %52, %54 : vector<8x128xf32>
    %56 = math.tanh %55 : vector<8x128xf32>
    %57 = arith.mulf %49, %33 : vector<8x128xf32>
    %cst_24 = arith.constant 1.000000e+00 : f32
    %58 = vector.broadcast %cst_24 : f32 to vector<8x128xf32>
    %59 = arith.subf %58, %49 : vector<8x128xf32>
    %60 = arith.mulf %59, %56 : vector<8x128xf32>
    %61 = arith.addf %57, %60 : vector<8x128xf32>
    %62 = arith.addi %5, %c1_i32 : i32
    %c8_i32_25 = arith.constant 8 : i32
    %63 = arith.cmpi slt, %62, %c8_i32_25 : i32
    %64 = arith.select %63, %61, %33 : vector<8x128xf32>
    %65 = arith.index_cast %c1_i32 : i32 to index
    %c0_26 = arith.constant 0 : index
    %c0_27 = arith.constant 0 : index
    %66 = vector.load %arg7[%65, %c0_26, %c0_27] : memref<8x8x128xf32, #tpu.memory_space<vmem>>, vector<1x8x128xf32>
    %67 = vector.shape_cast %66 : vector<1x8x128xf32> to vector<8x128xf32>
    %68 = vector.shape_cast %64 : vector<8x128xf32> to vector<1x8x128xf32>
    tpu.vector_store %arg7[%65, %c0_26, %c0_27], %68 {strides = array<i32>} : memref<8x8x128xf32, #tpu.memory_space<vmem>>, vector<1x8x128xf32>,
    %c2_i32 = arith.constant 2 : i32
    %69 = arith.index_cast %c2_i32 : i32 to index
    %c0_28 = arith.constant 0 : index
    %c0_29 = arith.constant 0 : index
    %70 = vector.load %arg2[%69, %c0_28, %c0_29] : memref<8x8x256xf32, #tpu.memory_space<vmem>>, vector<1x8x256xf32>
    %71 = vector.shape_cast %70 : vector<1x8x256xf32> to vector<8x256xf32>
    %cst_30 = arith.constant dense<0.000000e+00> : vector<8x256xf32>
    %72 = tpu.matmul %64, %3, %cst_30 {dimension_numbers = #tpu.dot_dimension_numbers<[1], [0], [0], [1], [0, 0, 1, 1], [], []>} : vector<8x128xf32>, vector<128x256xf32>, vector<8x256xf32> -> vector<8x256xf32>
    %73 = arith.addf %71, %72 : vector<8x256xf32>
    %74 = arith.negf %73 : vector<8x256xf32>
    %75 = math.exp %74 : vector<8x256xf32>
    %cst_31 = arith.constant 1.000000e+00 : f32
    %76 = vector.broadcast %cst_31 : f32 to vector<8x256xf32>
    %77 = arith.addf %76, %75 : vector<8x256xf32>
    %78 = arith.divf %76, %77 : vector<8x256xf32>
    %79 = vector.extract_strided_slice %78 {offsets = [0, 0], sizes = [8, 128], strides = [1, 1]} : vector<8x256xf32> to vector<8x128xf32>
    %80 = vector.extract_strided_slice %78 {offsets = [0, 128], sizes = [8, 128], strides = [1, 1]} : vector<8x256xf32> to vector<8x128xf32>
    %81 = arith.index_cast %c2_i32 : i32 to index
    %c0_32 = arith.constant 0 : index
    %c0_33 = arith.constant 0 : index
    %82 = vector.load %arg3[%81, %c0_32, %c0_33] : memref<8x8x128xf32, #tpu.memory_space<vmem>>, vector<1x8x128xf32>
    %83 = vector.shape_cast %82 : vector<1x8x128xf32> to vector<8x128xf32>
    %84 = arith.mulf %64, %79 : vector<8x128xf32>
    %cst_34 = arith.constant dense<0.000000e+00> : vector<8x128xf32>
    %85 = tpu.matmul %84, %4, %cst_34 {dimension_numbers = #tpu.dot_dimension_numbers<[1], [0], [0], [1], [0, 0, 1, 1], [], []>} : vector<8x128xf32>, vector<128x128xf32>, vector<8x128xf32> -> vector<8x128xf32>
    %86 = arith.addf %83, %85 : vector<8x128xf32>
    %87 = math.tanh %86 : vector<8x128xf32>
    %88 = arith.mulf %80, %64 : vector<8x128xf32>
    %cst_35 = arith.constant 1.000000e+00 : f32
    %89 = vector.broadcast %cst_35 : f32 to vector<8x128xf32>
    %90 = arith.subf %89, %80 : vector<8x128xf32>
    %91 = arith.mulf %90, %87 : vector<8x128xf32>
    %92 = arith.addf %88, %91 : vector<8x128xf32>
    %93 = arith.addi %5, %c2_i32 : i32
    %c8_i32_36 = arith.constant 8 : i32
    %94 = arith.cmpi slt, %93, %c8_i32_36 : i32
    %95 = arith.select %94, %92, %64 : vector<8x128xf32>
    %96 = arith.index_cast %c2_i32 : i32 to index
    %c0_37 = arith.constant 0 : index
    %c0_38 = arith.constant 0 : index
    %97 = vector.load %arg7[%96, %c0_37, %c0_38] : memref<8x8x128xf32, #tpu.memory_space<vmem>>, vector<1x8x128xf32>
    %98 = vector.shape_cast %97 : vector<1x8x128xf32> to vector<8x128xf32>
    %99 = vector.shape_cast %95 : vector<8x128xf32> to vector<1x8x128xf32>
    tpu.vector_store %arg7[%96, %c0_37, %c0_38], %99 {strides = array<i32>} : memref<8x8x128xf32, #tpu.memory_space<vmem>>, vector<1x8x128xf32>,
    %c3_i32 = arith.constant 3 : i32
    %100 = arith.index_cast %c3_i32 : i32 to index
    %c0_39 = arith.constant 0 : index
    %c0_40 = arith.constant 0 : index
    %101 = vector.load %arg2[%100, %c0_39, %c0_40] : memref<8x8x256xf32, #tpu.memory_space<vmem>>, vector<1x8x256xf32>
    %102 = vector.shape_cast %101 : vector<1x8x256xf32> to vector<8x256xf32>
    %cst_41 = arith.constant dense<0.000000e+00> : vector<8x256xf32>
    %103 = tpu.matmul %95, %3, %cst_41 {dimension_numbers = #tpu.dot_dimension_numbers<[1], [0], [0], [1], [0, 0, 1, 1], [], []>} : vector<8x128xf32>, vector<128x256xf32>, vector<8x256xf32> -> vector<8x256xf32>
    %104 = arith.addf %102, %103 : vector<8x256xf32>
    %105 = arith.negf %104 : vector<8x256xf32>
    %106 = math.exp %105 : vector<8x256xf32>
    %cst_42 = arith.constant 1.000000e+00 : f32
    %107 = vector.broadcast %cst_42 : f32 to vector<8x256xf32>
    %108 = arith.addf %107, %106 : vector<8x256xf32>
    %109 = arith.divf %107, %108 : vector<8x256xf32>
    %110 = vector.extract_strided_slice %109 {offsets = [0, 0], sizes = [8, 128], strides = [1, 1]} : vector<8x256xf32> to vector<8x128xf32>
    %111 = vector.extract_strided_slice %109 {offsets = [0, 128], sizes = [8, 128], strides = [1, 1]} : vector<8x256xf32> to vector<8x128xf32>
    %112 = arith.index_cast %c3_i32 : i32 to index
    %c0_43 = arith.constant 0 : index
    %c0_44 = arith.constant 0 : index
    %113 = vector.load %arg3[%112, %c0_43, %c0_44] : memref<8x8x128xf32, #tpu.memory_space<vmem>>, vector<1x8x128xf32>
    %114 = vector.shape_cast %113 : vector<1x8x128xf32> to vector<8x128xf32>
    %115 = arith.mulf %95, %110 : vector<8x128xf32>
    %cst_45 = arith.constant dense<0.000000e+00> : vector<8x128xf32>
    %116 = tpu.matmul %115, %4, %cst_45 {dimension_numbers = #tpu.dot_dimension_numbers<[1], [0], [0], [1], [0, 0, 1, 1], [], []>} : vector<8x128xf32>, vector<128x128xf32>, vector<8x128xf32> -> vector<8x128xf32>
    %117 = arith.addf %114, %116 : vector<8x128xf32>
    %118 = math.tanh %117 : vector<8x128xf32>
    %119 = arith.mulf %111, %95 : vector<8x128xf32>
    %cst_46 = arith.constant 1.000000e+00 : f32
    %120 = vector.broadcast %cst_46 : f32 to vector<8x128xf32>
    %121 = arith.subf %120, %111 : vector<8x128xf32>
    %122 = arith.mulf %121, %118 : vector<8x128xf32>
    %123 = arith.addf %119, %122 : vector<8x128xf32>
    %124 = arith.addi %5, %c3_i32 : i32
    %c8_i32_47 = arith.constant 8 : i32
    %125 = arith.cmpi slt, %124, %c8_i32_47 : i32
    %126 = arith.select %125, %123, %95 : vector<8x128xf32>
    %127 = arith.index_cast %c3_i32 : i32 to index
    %c0_48 = arith.constant 0 : index
    %c0_49 = arith.constant 0 : index
    %128 = vector.load %arg7[%127, %c0_48, %c0_49] : memref<8x8x128xf32, #tpu.memory_space<vmem>>, vector<1x8x128xf32>
    %129 = vector.shape_cast %128 : vector<1x8x128xf32> to vector<8x128xf32>
    %130 = vector.shape_cast %126 : vector<8x128xf32> to vector<1x8x128xf32>
    tpu.vector_store %arg7[%127, %c0_48, %c0_49], %130 {strides = array<i32>} : memref<8x8x128xf32, #tpu.memory_space<vmem>>, vector<1x8x128xf32>,
    %c4_i32 = arith.constant 4 : i32
    %131 = arith.index_cast %c4_i32 : i32 to index
    %c0_50 = arith.constant 0 : index
    %c0_51 = arith.constant 0 : index
    %132 = vector.load %arg2[%131, %c0_50, %c0_51] : memref<8x8x256xf32, #tpu.memory_space<vmem>>, vector<1x8x256xf32>
    %133 = vector.shape_cast %132 : vector<1x8x256xf32> to vector<8x256xf32>
    %cst_52 = arith.constant dense<0.000000e+00> : vector<8x256xf32>
    %134 = tpu.matmul %126, %3, %cst_52 {dimension_numbers = #tpu.dot_dimension_numbers<[1], [0], [0], [1], [0, 0, 1, 1], [], []>} : vector<8x128xf32>, vector<128x256xf32>, vector<8x256xf32> -> vector<8x256xf32>
    %135 = arith.addf %133, %134 : vector<8x256xf32>
    %136 = arith.negf %135 : vector<8x256xf32>
    %137 = math.exp %136 : vector<8x256xf32>
    %cst_53 = arith.constant 1.000000e+00 : f32
    %138 = vector.broadcast %cst_53 : f32 to vector<8x256xf32>
    %139 = arith.addf %138, %137 : vector<8x256xf32>
    %140 = arith.divf %138, %139 : vector<8x256xf32>
    %141 = vector.extract_strided_slice %140 {offsets = [0, 0], sizes = [8, 128], strides = [1, 1]} : vector<8x256xf32> to vector<8x128xf32>
    %142 = vector.extract_strided_slice %140 {offsets = [0, 128], sizes = [8, 128], strides = [1, 1]} : vector<8x256xf32> to vector<8x128xf32>
    %143 = arith.index_cast %c4_i32 : i32 to index
    %c0_54 = arith.constant 0 : index
    %c0_55 = arith.constant 0 : index
    %144 = vector.load %arg3[%143, %c0_54, %c0_55] : memref<8x8x128xf32, #tpu.memory_space<vmem>>, vector<1x8x128xf32>
    %145 = vector.shape_cast %144 : vector<1x8x128xf32> to vector<8x128xf32>
    %146 = arith.mulf %126, %141 : vector<8x128xf32>
    %cst_56 = arith.constant dense<0.000000e+00> : vector<8x128xf32>
    %147 = tpu.matmul %146, %4, %cst_56 {dimension_numbers = #tpu.dot_dimension_numbers<[1], [0], [0], [1], [0, 0, 1, 1], [], []>} : vector<8x128xf32>, vector<128x128xf32>, vector<8x128xf32> -> vector<8x128xf32>
    %148 = arith.addf %145, %147 : vector<8x128xf32>
    %149 = math.tanh %148 : vector<8x128xf32>
    %150 = arith.mulf %142, %126 : vector<8x128xf32>
    %cst_57 = arith.constant 1.000000e+00 : f32
    %151 = vector.broadcast %cst_57 : f32 to vector<8x128xf32>
    %152 = arith.subf %151, %142 : vector<8x128xf32>
    %153 = arith.mulf %152, %149 : vector<8x128xf32>
    %154 = arith.addf %150, %153 : vector<8x128xf32>
    %155 = arith.addi %5, %c4_i32 : i32
    %c8_i32_58 = arith.constant 8 : i32
    %156 = arith.cmpi slt, %155, %c8_i32_58 : i32
    %157 = arith.select %156, %154, %126 : vector<8x128xf32>
    %158 = arith.index_cast %c4_i32 : i32 to index
    %c0_59 = arith.constant 0 : index
    %c0_60 = arith.constant 0 : index
    %159 = vector.load %arg7[%158, %c0_59, %c0_60] : memref<8x8x128xf32, #tpu.memory_space<vmem>>, vector<1x8x128xf32>
    %160 = vector.shape_cast %159 : vector<1x8x128xf32> to vector<8x128xf32>
    %161 = vector.shape_cast %157 : vector<8x128xf32> to vector<1x8x128xf32>
    tpu.vector_store %arg7[%158, %c0_59, %c0_60], %161 {strides = array<i32>} : memref<8x8x128xf32, #tpu.memory_space<vmem>>, vector<1x8x128xf32>,
    %c5_i32 = arith.constant 5 : i32
    %162 = arith.index_cast %c5_i32 : i32 to index
    %c0_61 = arith.constant 0 : index
    %c0_62 = arith.constant 0 : index
    %163 = vector.load %arg2[%162, %c0_61, %c0_62] : memref<8x8x256xf32, #tpu.memory_space<vmem>>, vector<1x8x256xf32>
    %164 = vector.shape_cast %163 : vector<1x8x256xf32> to vector<8x256xf32>
    %cst_63 = arith.constant dense<0.000000e+00> : vector<8x256xf32>
    %165 = tpu.matmul %157, %3, %cst_63 {dimension_numbers = #tpu.dot_dimension_numbers<[1], [0], [0], [1], [0, 0, 1, 1], [], []>} : vector<8x128xf32>, vector<128x256xf32>, vector<8x256xf32> -> vector<8x256xf32>
    %166 = arith.addf %164, %165 : vector<8x256xf32>
    %167 = arith.negf %166 : vector<8x256xf32>
    %168 = math.exp %167 : vector<8x256xf32>
    %cst_64 = arith.constant 1.000000e+00 : f32
    %169 = vector.broadcast %cst_64 : f32 to vector<8x256xf32>
    %170 = arith.addf %169, %168 : vector<8x256xf32>
    %171 = arith.divf %169, %170 : vector<8x256xf32>
    %172 = vector.extract_strided_slice %171 {offsets = [0, 0], sizes = [8, 128], strides = [1, 1]} : vector<8x256xf32> to vector<8x128xf32>
    %173 = vector.extract_strided_slice %171 {offsets = [0, 128], sizes = [8, 128], strides = [1, 1]} : vector<8x256xf32> to vector<8x128xf32>
    %174 = arith.index_cast %c5_i32 : i32 to index
    %c0_65 = arith.constant 0 : index
    %c0_66 = arith.constant 0 : index
    %175 = vector.load %arg3[%174, %c0_65, %c0_66] : memref<8x8x128xf32, #tpu.memory_space<vmem>>, vector<1x8x128xf32>
    %176 = vector.shape_cast %175 : vector<1x8x128xf32> to vector<8x128xf32>
    %177 = arith.mulf %157, %172 : vector<8x128xf32>
    %cst_67 = arith.constant dense<0.000000e+00> : vector<8x128xf32>
    %178 = tpu.matmul %177, %4, %cst_67 {dimension_numbers = #tpu.dot_dimension_numbers<[1], [0], [0], [1], [0, 0, 1, 1], [], []>} : vector<8x128xf32>, vector<128x128xf32>, vector<8x128xf32> -> vector<8x128xf32>
    %179 = arith.addf %176, %178 : vector<8x128xf32>
    %180 = math.tanh %179 : vector<8x128xf32>
    %181 = arith.mulf %173, %157 : vector<8x128xf32>
    %cst_68 = arith.constant 1.000000e+00 : f32
    %182 = vector.broadcast %cst_68 : f32 to vector<8x128xf32>
    %183 = arith.subf %182, %173 : vector<8x128xf32>
    %184 = arith.mulf %183, %180 : vector<8x128xf32>
    %185 = arith.addf %181, %184 : vector<8x128xf32>
    %186 = arith.addi %5, %c5_i32 : i32
    %c8_i32_69 = arith.constant 8 : i32
    %187 = arith.cmpi slt, %186, %c8_i32_69 : i32
    %188 = arith.select %187, %185, %157 : vector<8x128xf32>
    %189 = arith.index_cast %c5_i32 : i32 to index
    %c0_70 = arith.constant 0 : index
    %c0_71 = arith.constant 0 : index
    %190 = vector.load %arg7[%189, %c0_70, %c0_71] : memref<8x8x128xf32, #tpu.memory_space<vmem>>, vector<1x8x128xf32>
    %191 = vector.shape_cast %190 : vector<1x8x128xf32> to vector<8x128xf32>
    %192 = vector.shape_cast %188 : vector<8x128xf32> to vector<1x8x128xf32>
    tpu.vector_store %arg7[%189, %c0_70, %c0_71], %192 {strides = array<i32>} : memref<8x8x128xf32, #tpu.memory_space<vmem>>, vector<1x8x128xf32>,
    %c6_i32 = arith.constant 6 : i32
    %193 = arith.index_cast %c6_i32 : i32 to index
    %c0_72 = arith.constant 0 : index
    %c0_73 = arith.constant 0 : index
    %194 = vector.load %arg2[%193, %c0_72, %c0_73] : memref<8x8x256xf32, #tpu.memory_space<vmem>>, vector<1x8x256xf32>
    %195 = vector.shape_cast %194 : vector<1x8x256xf32> to vector<8x256xf32>
    %cst_74 = arith.constant dense<0.000000e+00> : vector<8x256xf32>
    %196 = tpu.matmul %188, %3, %cst_74 {dimension_numbers = #tpu.dot_dimension_numbers<[1], [0], [0], [1], [0, 0, 1, 1], [], []>} : vector<8x128xf32>, vector<128x256xf32>, vector<8x256xf32> -> vector<8x256xf32>
    %197 = arith.addf %195, %196 : vector<8x256xf32>
    %198 = arith.negf %197 : vector<8x256xf32>
    %199 = math.exp %198 : vector<8x256xf32>
    %cst_75 = arith.constant 1.000000e+00 : f32
    %200 = vector.broadcast %cst_75 : f32 to vector<8x256xf32>
    %201 = arith.addf %200, %199 : vector<8x256xf32>
    %202 = arith.divf %200, %201 : vector<8x256xf32>
    %203 = vector.extract_strided_slice %202 {offsets = [0, 0], sizes = [8, 128], strides = [1, 1]} : vector<8x256xf32> to vector<8x128xf32>
    %204 = vector.extract_strided_slice %202 {offsets = [0, 128], sizes = [8, 128], strides = [1, 1]} : vector<8x256xf32> to vector<8x128xf32>
    %205 = arith.index_cast %c6_i32 : i32 to index
    %c0_76 = arith.constant 0 : index
    %c0_77 = arith.constant 0 : index
    %206 = vector.load %arg3[%205, %c0_76, %c0_77] : memref<8x8x128xf32, #tpu.memory_space<vmem>>, vector<1x8x128xf32>
    %207 = vector.shape_cast %206 : vector<1x8x128xf32> to vector<8x128xf32>
    %208 = arith.mulf %188, %203 : vector<8x128xf32>
    %cst_78 = arith.constant dense<0.000000e+00> : vector<8x128xf32>
    %209 = tpu.matmul %208, %4, %cst_78 {dimension_numbers = #tpu.dot_dimension_numbers<[1], [0], [0], [1], [0, 0, 1, 1], [], []>} : vector<8x128xf32>, vector<128x128xf32>, vector<8x128xf32> -> vector<8x128xf32>
    %210 = arith.addf %207, %209 : vector<8x128xf32>
    %211 = math.tanh %210 : vector<8x128xf32>
    %212 = arith.mulf %204, %188 : vector<8x128xf32>
    %cst_79 = arith.constant 1.000000e+00 : f32
    %213 = vector.broadcast %cst_79 : f32 to vector<8x128xf32>
    %214 = arith.subf %213, %204 : vector<8x128xf32>
    %215 = arith.mulf %214, %211 : vector<8x128xf32>
    %216 = arith.addf %212, %215 : vector<8x128xf32>
    %217 = arith.addi %5, %c6_i32 : i32
    %c8_i32_80 = arith.constant 8 : i32
    %218 = arith.cmpi slt, %217, %c8_i32_80 : i32
    %219 = arith.select %218, %216, %188 : vector<8x128xf32>
    %220 = arith.index_cast %c6_i32 : i32 to index
    %c0_81 = arith.constant 0 : index
    %c0_82 = arith.constant 0 : index
    %221 = vector.load %arg7[%220, %c0_81, %c0_82] : memref<8x8x128xf32, #tpu.memory_space<vmem>>, vector<1x8x128xf32>
    %222 = vector.shape_cast %221 : vector<1x8x128xf32> to vector<8x128xf32>
    %223 = vector.shape_cast %219 : vector<8x128xf32> to vector<1x8x128xf32>
    tpu.vector_store %arg7[%220, %c0_81, %c0_82], %223 {strides = array<i32>} : memref<8x8x128xf32, #tpu.memory_space<vmem>>, vector<1x8x128xf32>,
    %c7_i32 = arith.constant 7 : i32
    %224 = arith.index_cast %c7_i32 : i32 to index
    %c0_83 = arith.constant 0 : index
    %c0_84 = arith.constant 0 : index
    %225 = vector.load %arg2[%224, %c0_83, %c0_84] : memref<8x8x256xf32, #tpu.memory_space<vmem>>, vector<1x8x256xf32>
    %226 = vector.shape_cast %225 : vector<1x8x256xf32> to vector<8x256xf32>
    %cst_85 = arith.constant dense<0.000000e+00> : vector<8x256xf32>
    %227 = tpu.matmul %219, %3, %cst_85 {dimension_numbers = #tpu.dot_dimension_numbers<[1], [0], [0], [1], [0, 0, 1, 1], [], []>} : vector<8x128xf32>, vector<128x256xf32>, vector<8x256xf32> -> vector<8x256xf32>
    %228 = arith.addf %226, %227 : vector<8x256xf32>
    %229 = arith.negf %228 : vector<8x256xf32>
    %230 = math.exp %229 : vector<8x256xf32>
    %cst_86 = arith.constant 1.000000e+00 : f32
    %231 = vector.broadcast %cst_86 : f32 to vector<8x256xf32>
    %232 = arith.addf %231, %230 : vector<8x256xf32>
    %233 = arith.divf %231, %232 : vector<8x256xf32>
    %234 = vector.extract_strided_slice %233 {offsets = [0, 0], sizes = [8, 128], strides = [1, 1]} : vector<8x256xf32> to vector<8x128xf32>
    %235 = vector.extract_strided_slice %233 {offsets = [0, 128], sizes = [8, 128], strides = [1, 1]} : vector<8x256xf32> to vector<8x128xf32>
    %236 = arith.index_cast %c7_i32 : i32 to index
    %c0_87 = arith.constant 0 : index
    %c0_88 = arith.constant 0 : index
    %237 = vector.load %arg3[%236, %c0_87, %c0_88] : memref<8x8x128xf32, #tpu.memory_space<vmem>>, vector<1x8x128xf32>
    %238 = vector.shape_cast %237 : vector<1x8x128xf32> to vector<8x128xf32>
    %239 = arith.mulf %219, %234 : vector<8x128xf32>
    %cst_89 = arith.constant dense<0.000000e+00> : vector<8x128xf32>
    %240 = tpu.matmul %239, %4, %cst_89 {dimension_numbers = #tpu.dot_dimension_numbers<[1], [0], [0], [1], [0, 0, 1, 1], [], []>} : vector<8x128xf32>, vector<128x128xf32>, vector<8x128xf32> -> vector<8x128xf32>
    %241 = arith.addf %238, %240 : vector<8x128xf32>
    %242 = math.tanh %241 : vector<8x128xf32>
    %243 = arith.mulf %235, %219 : vector<8x128xf32>
    %cst_90 = arith.constant 1.000000e+00 : f32
    %244 = vector.broadcast %cst_90 : f32 to vector<8x128xf32>
    %245 = arith.subf %244, %235 : vector<8x128xf32>
    %246 = arith.mulf %245, %242 : vector<8x128xf32>
    %247 = arith.addf %243, %246 : vector<8x128xf32>
    %248 = arith.addi %5, %c7_i32 : i32
    %c8_i32_91 = arith.constant 8 : i32
    %249 = arith.cmpi slt, %248, %c8_i32_91 : i32
    %250 = arith.select %249, %247, %219 : vector<8x128xf32>
    %251 = arith.index_cast %c7_i32 : i32 to index
    %c0_92 = arith.constant 0 : index
    %c0_93 = arith.constant 0 : index
    %252 = vector.load %arg7[%251, %c0_92, %c0_93] : memref<8x8x128xf32, #tpu.memory_space<vmem>>, vector<1x8x128xf32>
    %253 = vector.shape_cast %252 : vector<1x8x128xf32> to vector<8x128xf32>
    %254 = vector.shape_cast %250 : vector<8x128xf32> to vector<1x8x128xf32>
    tpu.vector_store %arg7[%251, %c0_92, %c0_93], %254 {strides = array<i32>} : memref<8x8x128xf32, #tpu.memory_space<vmem>>, vector<1x8x128xf32>,
    %c8_i32_94 = arith.constant 8 : i32
    %c0_95 = arith.constant 0 : index
    %c0_96 = arith.constant 0 : index
    %255 = vector.load %arg9[%c0_95, %c0_96] : memref<8x128xf32, #tpu.memory_space<vmem>>, vector<8x128xf32>
    tpu.vector_store %arg9[%c0_95, %c0_96], %250 {strides = array<i32>} : memref<8x128xf32, #tpu.memory_space<vmem>>, vector<8x128xf32>,
    %c0_i32_97 = arith.constant 0 : i32
    %256 = arith.cmpi eq, %arg1, %c0_i32_97 : i32
    %257 = arith.extui %256 : i1 to i32
    %c0_i32_98 = arith.constant 0 : i32
    %258 = arith.cmpi ne, %257, %c0_i32_98 : i32
    scf.if %258 {
      %c0_99 = arith.constant 0 : index
      %c0_100 = arith.constant 0 : index
      %259 = vector.load %arg8[%c0_99, %c0_100] : memref<8x128xf32, #tpu.memory_space<vmem>>, vector<8x128xf32>
      tpu.vector_store %arg8[%c0_99, %c0_100], %250 {strides = array<i32>} : memref<8x128xf32, #tpu.memory_space<vmem>>, vector<8x128xf32>,
    } else {
    }
    return
  }
  func.func @transform_0(%arg0: i32, %arg1: i32) -> (i32, i32, i32) {
    %c0_i32 = arith.constant 0 : i32
    %c0_i32_0 = arith.constant 0 : i32
    return %arg1, %arg0, %c0_i32 : i32, i32, i32
  }
  func.func @transform_1(%arg0: i32, %arg1: i32) -> (i32, i32, i32) {
    %c0_i32 = arith.constant 0 : i32
    %c0_i32_0 = arith.constant 0 : i32
    return %arg1, %arg0, %c0_i32 : i32, i32, i32
  }
  func.func @transform_2(%arg0: i32, %arg1: i32) -> (i32, i32) {
    %c0_i32 = arith.constant 0 : i32
    %c0_i32_0 = arith.constant 0 : i32
    return %arg0, %c0_i32 : i32, i32
  }
  func.func @transform_3(%arg0: i32, %arg1: i32) -> (i32, i32) {
    %c0_i32 = arith.constant 0 : i32
    %c0_i32_0 = arith.constant 0 : i32
    %c0_i32_1 = arith.constant 0 : i32
    return %c0_i32, %c0_i32_0 : i32, i32
  }
  func.func @transform_4(%arg0: i32, %arg1: i32) -> (i32, i32) {
    %c0_i32 = arith.constant 0 : i32
    %c0_i32_0 = arith.constant 0 : i32
    %c0_i32_1 = arith.constant 0 : i32
    return %c0_i32, %c0_i32_0 : i32, i32
  }
  func.func @transform_5(%arg0: i32, %arg1: i32) -> (i32, i32, i32) {
    %c0_i32 = arith.constant 0 : i32
    %c0_i32_0 = arith.constant 0 : i32
    return %arg1, %arg0, %c0_i32 : i32, i32, i32
  }
  func.func @transform_6(%arg0: i32, %arg1: i32) -> (i32, i32) {
    %c0_i32 = arith.constant 0 : i32
    %c0_i32_0 = arith.constant 0 : i32
    return %arg0, %c0_i32 : i32, i32
  }
}

</mosaic_0001>

<llo_original>
// kernel: gru_forward.6
$region0: #{gru_forward.6}
  #allocation0 [shape = 'u32[]', space=smem, size = 0x4, offset = 0x4, fixed_abs, tag = 'smem constant byte address 0x4 - core index']
  #allocation1 [shape = 'u32[144,128]{1,0:T(1,128)}', space=vmem, size = 0x12000, scoped, tag = 'internal scratch']
  %s0 = inlined_call_operand.vmem [shape: f32[64,128], index: 0, kind: input, shape index: {}]
  %s1 = inlined_call_operand.vmem [shape: f32[128,384], index: 1, kind: input, shape index: {}]
  %s2 = inlined_call_operand.vmem [shape: f32[1,384], index: 2, kind: input, shape index: {}]
  %s3 = inlined_call_operand.vmem [shape: f32[64,256], index: 3, kind: output, shape index: {0}]
  %s4 = inlined_call_operand.vmem [shape: f32[64,128], index: 4, kind: output, shape index: {1}]
  %5 = xla_tuple %s3, %s4
  %s6 = sld [smem:[#allocation0]]
  $region30: #{gru_forward.6} parent=0
    _
  %s8 = ssub.s32 1, %s6
  %s9 = scalar_select 0, %s8, %s6
  // Predicated region
  $region2: #{gru_forward.6} parent=0 // pred_check
    _
  $region3: #{gru_forward.6} parent=0 // pred_check_branch
    %11 = sbr.rel (0) target = $region5
  $region4: #{gru_forward.6} parent=0 // pred_region
    _
  $region5: #{gru_forward.6} parent=0 // pred_fallthru
    _
  // Predicated region
  $region6: #{gru_forward.6} parent=0 // pred_check
    _
  $region7: #{gru_forward.6} parent=0 // pred_check_branch
    %13 = sbr.rel (0) target = $region9
  $region8: #{gru_forward.6} parent=0 // pred_region
    _
  $region9: #{gru_forward.6} parent=0 // pred_fallthru
    _
  // Predicated region
  $region10: #{gru_forward.6} parent=0 // pred_check
    _
  $region11: #{gru_forward.6} parent=0 // pred_check_branch
    %15 = sbr.rel (0) target = $region13
  $region12: #{gru_forward.6} parent=0 // pred_region
    _
  $region13: #{gru_forward.6} parent=0 // pred_fallthru
    _
  %v16 = vld [vmem:[%s0] sm:$0xff]
  %v17 = vld [vmem:[%s0 + $0x8] sm:$0xff]
  %v18 = vld [vmem:[%s0 + $0x10] sm:$0xff]
  %v19 = vld [vmem:[%s0 + $0x18] sm:$0xff]
  %v20 = vld [vmem:[%s0 + $0x20] sm:$0xff]
  %v21 = vld [vmem:[%s0 + $0x28] sm:$0xff]
  %v22 = vld [vmem:[%s0 + $0x30] sm:$0xff]
  %v23 = vld [vmem:[%s0 + $0x38] sm:$0xff]
  %v24 = vld [vmem:[%s1] sm:$0xff]
  %v25 = vld [vmem:[%s1 + $0x8] sm:$0xff]
  %v26 = vld [vmem:[%s1 + $0x10] sm:$0xff]
  %v27 = vld [vmem:[%s1 + $0x18] sm:$0xff]
  %v28 = vld [vmem:[%s1 + $0x20] sm:$0xff]
  %v29 = vld [vmem:[%s1 + $0x28] sm:$0xff]
  %v30 = vld [vmem:[%s1 + $0x30] sm:$0xff]
  %v31 = vld [vmem:[%s1 + $0x38] sm:$0xff]
  %v32 = vld [vmem:[%s1 + $0x40] sm:$0xff]
  %v33 = vld [vmem:[%s1 + $0x48] sm:$0xff]
  %v34 = vld [vmem:[%s1 + $0x50] sm:$0xff]
  %v35 = vld [vmem:[%s1 + $0x58] sm:$0xff]
  %v36 = vld [vmem:[%s1 + $0x60] sm:$0xff]
  %v37 = vld [vmem:[%s1 + $0x68] sm:$0xff]
  %v38 = vld [vmem:[%s1 + $0x70] sm:$0xff]
  %v39 = vld [vmem:[%s1 + $0x78] sm:$0xff]
  %v40 = vld [vmem:[%s1 + $0x80] sm:$0xff]
  %v41 = vld [vmem:[%s1 + $0x88] sm:$0xff]
  %v42 = vld [vmem:[%s1 + $0x90] sm:$0xff]
  %v43 = vld [vmem:[%s1 + $0x98] sm:$0xff]
  %v44 = vld [vmem:[%s1 + $0xa0] sm:$0xff]
  %v45 = vld [vmem:[%s1 + $0xa8] sm:$0xff]
  %v46 = vld [vmem:[%s1 + $0xb0] sm:$0xff]
  %v47 = vld [vmem:[%s1 + $0xb8] sm:$0xff]
  %v48 = vld [vmem:[%s1 + $0xc0] sm:$0xff]
  %v49 = vld [vmem:[%s1 + $0xc8] sm:$0xff]
  %v50 = vld [vmem:[%s1 + $0xd0] sm:$0xff]
  %v51 = vld [vmem:[%s1 + $0xd8] sm:$0xff]
  %v52 = vld [vmem:[%s1 + $0xe0] sm:$0xff]
  %v53 = vld [vmem:[%s1 + $0xe8] sm:$0xff]
  %v54 = vld [vmem:[%s1 + $0xf0] sm:$0xff]
  %v55 = vld [vmem:[%s1 + $0xf8] sm:$0xff]
  %v56 = vld [vmem:[%s1 + $0x100] sm:$0xff]
  %v57 = vld [vmem:[%s1 + $0x108] sm:$0xff]
  %v58 = vld [vmem:[%s1 + $0x110] sm:$0xff]
  %v59 = vld [vmem:[%s1 + $0x118] sm:$0xff]
  %v60 = vld [vmem:[%s1 + $0x120] sm:$0xff]
  %v61 = vld [vmem:[%s1 + $0x128] sm:$0xff]
  %v62 = vld [vmem:[%s1 + $0x130] sm:$0xff]
  %v63 = vld [vmem:[%s1 + $0x138] sm:$0xff]
  %v64 = vld [vmem:[%s1 + $0x140] sm:$0xff]
  %v65 = vld [vmem:[%s1 + $0x148] sm:$0xff]
  %v66 = vld [vmem:[%s1 + $0x150] sm:$0xff]
  %v67 = vld [vmem:[%s1 + $0x158] sm:$0xff]
  %v68 = vld [vmem:[%s1 + $0x160] sm:$0xff]
  %v69 = vld [vmem:[%s1 + $0x168] sm:$0xff]
  %v70 = vld [vmem:[%s1 + $0x170] sm:$0xff]
  %v71 = vld [vmem:[%s1 + $0x178] sm:$0xff]
  %v72 = vld [vmem:[%s2] sm:$0x7]
  %v74 = vlaneseq
  %v75 = vshrl.u32 %v74, 7
  %v76 = vsub.s32 0, %v75
  %v77 = vrot.slane %v72, %v76
  %v78 = vlaneseq
  %v79 = vshrl.u32 %v78, 7
  %v80 = vsub.s32 1, %v79
  %v81 = vrot.slane %v72, %v80
  %v82 = vlaneseq
  %v83 = vshrl.u32 %v82, 7
  %v84 = vsub.s32 2, %v83
  %v85 = vrot.slane %v72, %v84
  %89 = vmatprep.subr.mxu0 %v70
  %90 = vmatpush1.msra.mxu0 %v69
  %91 = vmatprep.subr.mxu0 %v67
  %92 = vmatpush1.msra.mxu0 %v66
  %93 = vmatprep.subr.mxu0 %v64
  %94 = vmatpush1.msra.mxu0 %v63
  %95 = vmatprep.subr.mxu0 %v61
  %96 = vmatpush1.msra.mxu0 %v60
  %97 = vmatprep.subr.mxu0 %v58
  %98 = vmatpush1.msra.mxu0 %v57
  %99 = vmatprep.subr.mxu0 %v55
  %100 = vmatpush1.msra.mxu0 %v54
  %101 = vmatprep.subr.mxu0 %v52
  %102 = vmatpush1.msra.mxu0 %v51
  %103 = vmatprep.subr.mxu0 %v49
  %104 = vmatpush1.msra.mxu0 %v48
  %105 = vmatprep.subr.mxu0 %v46
  %106 = vmatpush1.msra.mxu0 %v45
  %107 = vmatprep.subr.mxu0 %v43
  %108 = vmatpush1.msra.mxu0 %v42
  %109 = vmatprep.subr.mxu0 %v40
  %110 = vmatpush1.msra.mxu0 %v39
  %111 = vmatprep.subr.mxu0 %v37
  %112 = vmatpush1.msra.mxu0 %v36
  %113 = vmatprep.subr.mxu0 %v34
  %114 = vmatpush1.msra.mxu0 %v33
  %115 = vmatprep.subr.mxu0 %v31
  %116 = vmatpush1.msra.mxu0 %v30
  %117 = vmatprep.subr.mxu0 %v28
  %118 = vmatpush1.msra.mxu0 %v27
  %119 = vmatprep.subr.mxu0 %v25
  %120 = vmatpush1.msra.mxu0 %v24
  %121 = vmatprep.subr.mxu0 0.0
  %122 = vmatpush2.msra.mxu0 0.0
  %123 = vmatprep.subr.mxu0 0.0
  %124 = vmatpush2.msra.mxu0 0.0
  %125 = vmatprep.subr.mxu0 0.0
  %126 = vmatpush2.msra.mxu0 0.0
  %127 = vmatprep.subr.mxu0 0.0
  %128 = vmatpush2.msra.mxu0 0.0
  %129 = vmatprep.subr.mxu0 0.0
  %130 = vmatpush2.msra.mxu0 0.0
  %131 = vmatprep.subr.mxu0 0.0
  %132 = vmatpush2.msra.mxu0 0.0
  %133 = vmatprep.subr.mxu0 0.0
  %134 = vmatpush2.msra.mxu0 0.0
  %135 = vmatprep.subr.mxu0 0.0
  %136 = vmatpush2.msra.mxu0 0.0
  %137 = vmatprep.subr.mxu0 0.0
  %138 = vmatpush2.msra.mxu0 0.0
  %139 = vmatprep.subr.mxu0 0.0
  %140 = vmatpush2.msra.mxu0 0.0
  %141 = vmatprep.subr.mxu0 0.0
  %142 = vmatpush2.msra.mxu0 0.0
  %143 = vmatprep.subr.mxu0 0.0
  %144 = vmatpush2.msra.mxu0 0.0
  %145 = vmatprep.subr.mxu0 0.0
  %146 = vmatpush2.msra.mxu0 0.0
  %147 = vmatprep.subr.mxu0 0.0
  %148 = vmatpush2.msra.mxu0 0.0
  %149 = vmatprep.subr.mxu0 0.0
  %150 = vmatpush2.msra.mxu0 0.0
  %151 = vmatprep.subr.mxu0 0.0
  %152 = vmatpush2.msra.mxu0 0.0
  %153 = vmatprep.mubr.f32.mxu0 0.0
  %154 = vmatmul.mubr.f32.gmra.mxu0 %v16
  %v155 = vpop.f32.mrf.mxu0
  %v156 = vadd.f32 %v77, %v155
  %v157 = vpop.f32.mrf.mxu0
  %v158 = vadd.f32 %v81, %v157
  %159 = vmatprep.mubr.f32.mxu0 0.0
  %160 = vmatmul.mubr.f32.gmra.mxu0 %v17
  %v161 = vpop.f32.mrf.mxu0
  %v162 = vadd.f32 %v77, %v161
  %v163 = vpop.f32.mrf.mxu0
  %v164 = vadd.f32 %v81, %v163
  %165 = vmatprep.mubr.f32.mxu0 0.0
  %166 = vmatmul.mubr.f32.gmra.mxu0 %v18
  %v167 = vpop.f32.mrf.mxu0
  %v168 = vadd.f32 %v77, %v167
  %v169 = vpop.f32.mrf.mxu0
  %v170 = vadd.f32 %v81, %v169
  %171 = vmatprep.mubr.f32.mxu0 0.0
  %172 = vmatmul.mubr.f32.gmra.mxu0 %v19
  %v173 = vpop.f32.mrf.mxu0
  %v174 = vadd.f32 %v77, %v173
  %v175 = vpop.f32.mrf.mxu0
  %v176 = vadd.f32 %v81, %v175
  %177 = vmatprep.mubr.f32.mxu0 0.0
  %178 = vmatmul.mubr.f32.gmra.mxu0 %v20
  %v179 = vpop.f32.mrf.mxu0
  %v180 = vadd.f32 %v77, %v179
  %v181 = vpop.f32.mrf.mxu0
  %v182 = vadd.f32 %v81, %v181
  %183 = vmatprep.mubr.f32.mxu0 0.0
  %184 = vmatmul.mubr.f32.gmra.mxu0 %v21
  %v185 = vpop.f32.mrf.mxu0
  %v186 = vadd.f32 %v77, %v185
  %v187 = vpop.f32.mrf.mxu0
  %v188 = vadd.f32 %v81, %v187
  %189 = vmatprep.mubr.f32.mxu0 0.0
  %190 = vmatmul.mubr.f32.gmra.mxu0 %v22
  %v191 = vpop.f32.mrf.mxu0
  %v192 = vadd.f32 %v77, %v191
  %v193 = vpop.f32.mrf.mxu0
  %v194 = vadd.f32 %v81, %v193
  %195 = vmatprep.mubr.f32.mxu0 0.0
  %196 = vmatmul.mubr.f32.gmra.mxu0 %v23
  %v197 = vpop.f32.mrf.mxu0
  %v198 = vadd.f32 %v77, %v197
  %v199 = vpop.f32.mrf.mxu0
  %v200 = vadd.f32 %v81, %v199
  %201 = vdwg.mxu0
  %202 = vmatprep.subr.mxu0 0.0
  %203 = vmatpush1.msra.mxu0 %v71
  %204 = vmatprep.subr.mxu0 0.0
  %205 = vmatpush1.msra.mxu0 %v68
  %206 = vmatprep.subr.mxu0 0.0
  %207 = vmatpush1.msra.mxu0 %v65
  %208 = vmatprep.subr.mxu0 0.0
  %209 = vmatpush1.msra.mxu0 %v62
  %210 = vmatprep.subr.mxu0 0.0
  %211 = vmatpush1.msra.mxu0 %v59
  %212 = vmatprep.subr.mxu0 0.0
  %213 = vmatpush1.msra.mxu0 %v56
  %214 = vmatprep.subr.mxu0 0.0
  %215 = vmatpush1.msra.mxu0 %v53
  %216 = vmatprep.subr.mxu0 0.0
  %217 = vmatpush1.msra.mxu0 %v50
  %218 = vmatprep.subr.mxu0 0.0
  %219 = vmatpush1.msra.mxu0 %v47
  %220 = vmatprep.subr.mxu0 0.0
  %221 = vmatpush1.msra.mxu0 %v44
  %222 = vmatprep.subr.mxu0 0.0
  %223 = vmatpush1.msra.mxu0 %v41
  %224 = vmatprep.subr.mxu0 0.0
  %225 = vmatpush1.msra.mxu0 %v38
  %226 = vmatprep.subr.mxu0 0.0
  %227 = vmatpush1.msra.mxu0 %v35
  %228 = vmatprep.subr.mxu0 0.0
  %229 = vmatpush1.msra.mxu0 %v32
  %230 = vmatprep.subr.mxu0 0.0
  %231 = vmatpush1.msra.mxu0 %v29
  %232 = vmatprep.subr.mxu0 0.0
  %233 = vmatpush1.msra.mxu0 %v26
  %234 = vmatprep.subr.mxu0 0.0
  %235 = vmatpush2.msra.mxu0 0.0
  %236 = vmatprep.subr.mxu0 0.0
  %237 = vmatpush2.msra.mxu0 0.0
  %238 = vmatprep.subr.mxu0 0.0
  %239 = vmatpush2.msra.mxu0 0.0
  %240 = vmatprep.subr.mxu0 0.0
  %241 = vmatpush2.msra.mxu0 0.0
  %242 = vmatprep.subr.mxu0 0.0
  %243 = vmatpush2.msra.mxu0 0.0
  %244 = vmatprep.subr.mxu0 0.0
  %245 = vmatpush2.msra.mxu0 0.0
  %246 = vmatprep.subr.mxu0 0.0
  %247 = vmatpush2.msra.mxu0 0.0
  %248 = vmatprep.subr.mxu0 0.0
  %249 = vmatpush2.msra.mxu0 0.0
  %250 = vmatprep.subr.mxu0 0.0
  %251 = vmatpush2.msra.mxu0 0.0
  %252 = vmatprep.subr.mxu0 0.0
  %253 = vmatpush2.msra.mxu0 0.0
  %254 = vmatprep.subr.mxu0 0.0
  %255 = vmatpush2.msra.mxu0 0.0
  %256 = vmatprep.subr.mxu0 0.0
  %257 = vmatpush2.msra.mxu0 0.0
  %258 = vmatprep.subr.mxu0 0.0
  %259 = vmatpush2.msra.mxu0 0.0
  %260 = vmatprep.subr.mxu0 0.0
  %261 = vmatpush2.msra.mxu0 0.0
  %262 = vmatprep.subr.mxu0 0.0
  %263 = vmatpush2.msra.mxu0 0.0
  %264 = vmatprep.subr.mxu0 0.0
  %265 = vmatpush2.msra.mxu0 0.0
  %266 = vmatprep.mubr.f32.mxu0 0.0
  %267 = vmatmul.mubr.f32.gmra.mxu0 %v16
  %v268 = vpop.f32.mrf.mxu0
  %v269 = vadd.f32 %v85, %v268
  %v270 = vpop.f32.mrf.mxu0
  %271 = vmatprep.mubr.f32.mxu0 0.0
  %272 = vmatmul.mubr.f32.gmra.mxu0 %v17
  %v273 = vpop.f32.mrf.mxu0
  %v274 = vadd.f32 %v85, %v273
  %v275 = vpop.f32.mrf.mxu0
  %276 = vmatprep.mubr.f32.mxu0 0.0
  %277 = vmatmul.mubr.f32.gmra.mxu0 %v18
  %v278 = vpop.f32.mrf.mxu0
  %v279 = vadd.f32 %v85, %v278
  %v280 = vpop.f32.mrf.mxu0
  %281 = vmatprep.mubr.f32.mxu0 0.0
  %282 = vmatmul.mubr.f32.gmra.mxu0 %v19
  %v283 = vpop.f32.mrf.mxu0
  %v284 = vadd.f32 %v85, %v283
  %v285 = vpop.f32.mrf.mxu0
  %286 = vmatprep.mubr.f32.mxu0 0.0
  %287 = vmatmul.mubr.f32.gmra.mxu0 %v20
  %v288 = vpop.f32.mrf.mxu0
  %v289 = vadd.f32 %v85, %v288
  %v290 = vpop.f32.mrf.mxu0
  %291 = vmatprep.mubr.f32.mxu0 0.0
  %292 = vmatmul.mubr.f32.gmra.mxu0 %v21
  %v293 = vpop.f32.mrf.mxu0
  %v294 = vadd.f32 %v85, %v293
  %v295 = vpop.f32.mrf.mxu0
  %296 = vmatprep.mubr.f32.mxu0 0.0
  %297 = vmatmul.mubr.f32.gmra.mxu0 %v22
  %v298 = vpop.f32.mrf.mxu0
  %v299 = vadd.f32 %v85, %v298
  %v300 = vpop.f32.mrf.mxu0
  %301 = vmatprep.mubr.f32.mxu0 0.0
  %302 = vmatmul.mubr.f32.gmra.mxu0 %v23
  %v303 = vpop.f32.mrf.mxu0
  %v304 = vadd.f32 %v85, %v303
  %v305 = vpop.f32.mrf.mxu0
  %306 = vdwg.mxu0
  %307 = vst [vmem:[%s3] sm:$0xff] %v156
  %308 = vst [vmem:[%s3 + $0x8] sm:$0xff] %v158
  %309 = vst [vmem:[%s3 + $0x10] sm:$0xff] %v162
  %310 = vst [vmem:[%s3 + $0x18] sm:$0xff] %v164
  %311 = vst [vmem:[%s3 + $0x20] sm:$0xff] %v168
  %312 = vst [vmem:[%s3 + $0x28] sm:$0xff] %v170
  %313 = vst [vmem:[%s3 + $0x30] sm:$0xff] %v174
  %314 = vst [vmem:[%s3 + $0x38] sm:$0xff] %v176
  %315 = vst [vmem:[%s3 + $0x40] sm:$0xff] %v180
  %316 = vst [vmem:[%s3 + $0x48] sm:$0xff] %v182
  %317 = vst [vmem:[%s3 + $0x50] sm:$0xff] %v186
  %318 = vst [vmem:[%s3 + $0x58] sm:$0xff] %v188
  %319 = vst [vmem:[%s3 + $0x60] sm:$0xff] %v192
  %320 = vst [vmem:[%s3 + $0x68] sm:$0xff] %v194
  %321 = vst [vmem:[%s3 + $0x70] sm:$0xff] %v198
  %322 = vst [vmem:[%s3 + $0x78] sm:$0xff] %v200
  %323 = vst [vmem:[%s4] sm:$0xff] %v269
  %324 = vst [vmem:[%s4 + $0x8] sm:$0xff] %v274
  %325 = vst [vmem:[%s4 + $0x10] sm:$0xff] %v279
  %326 = vst [vmem:[%s4 + $0x18] sm:$0xff] %v284
  %327 = vst [vmem:[%s4 + $0x20] sm:$0xff] %v289
  %328 = vst [vmem:[%s4 + $0x28] sm:$0xff] %v294
  %329 = vst [vmem:[%s4 + $0x30] sm:$0xff] %v299
  %330 = vst [vmem:[%s4 + $0x38] sm:$0xff] %v304
  // Predicated region
  $region14: #{gru_forward.6} parent=0 // pred_check
    _
  $region15: #{gru_forward.6} parent=0 // pred_check_branch
    %332 = sbr.rel (0) target = $region17
  $region16: #{gru_forward.6} parent=0 // pred_region
    _
  $region17: #{gru_forward.6} parent=0 // pred_fallthru
    _
  // Predicated region
  $region18: #{gru_forward.6} parent=0 // pred_check
    _
  $region19: #{gru_forward.6} parent=0 // pred_check_branch
    %334 = sbr.rel (0) target = $region21
  $region20: #{gru_forward.6} parent=0 // pred_region
    _
  $region21: #{gru_forward.6} parent=0 // pred_fallthru
    _
  // Predicated region
  $region22: #{gru_forward.6} parent=0 // pred_check
    _
  $region23: #{gru_forward.6} parent=0 // pred_check_branch
    %336 = sbr.rel (0) target = $region25
  $region24: #{gru_forward.6} parent=0 // pred_region
    _
  $region25: #{gru_forward.6} parent=0 // pred_fallthru
    _
  // Predicated region
  $region26: #{gru_forward.6} parent=0 // pred_check
    _
  $region27: #{gru_forward.6} parent=0 // pred_check_branch
    %338 = sbr.rel (0) target = $region29
  $region28: #{gru_forward.6} parent=0 // pred_region
    _
  $region29: #{gru_forward.6} parent=0 // pred_fallthru
    _

// kernel: gru_forward.4
$region0: #{gru_forward.4}
  #allocation0 [shape = 'u32[]', space=smem, size = 0x4, offset = 0x4, fixed_abs, tag = 'smem constant byte address 0x4 - core index']
  #allocation1 [shape = 'u32[144,128]{1,0:T(1,128)}', space=vmem, size = 0x12000, scoped, tag = 'internal scratch']
  %s0 = inlined_call_operand.vmem [shape: f32[64,16], index: 0, kind: input, shape index: {}]
  %s1 = inlined_call_operand.vmem [shape: f32[16,384], index: 1, kind: input, shape index: {}]
  %s2 = inlined_call_operand.vmem [shape: f32[1,384], index: 2, kind: input, shape index: {}]
  %s3 = inlined_call_operand.vmem [shape: f32[64,256], index: 3, kind: output, shape index: {0}]
  %s4 = inlined_call_operand.vmem [shape: f32[64,128], index: 4, kind: output, shape index: {1}]
  %5 = xla_tuple %s3, %s4
  %s6 = sld [smem:[#allocation0]]
  $region30: #{gru_forward.4} parent=0
    _
  %s8 = ssub.s32 1, %s6
  %s9 = scalar_select 0, %s8, %s6
  // Predicated region
  $region2: #{gru_forward.4} parent=0 // pred_check
    _
  $region3: #{gru_forward.4} parent=0 // pred_check_branch
    %11 = sbr.rel (0) target = $region5
  $region4: #{gru_forward.4} parent=0 // pred_region
    _
  $region5: #{gru_forward.4} parent=0 // pred_fallthru
    _
  // Predicated region
  $region6: #{gru_forward.4} parent=0 // pred_check
    _
  $region7: #{gru_forward.4} parent=0 // pred_check_branch
    %13 = sbr.rel (0) target = $region9
  $region8: #{gru_forward.4} parent=0 // pred_region
    _
  $region9: #{gru_forward.4} parent=0 // pred_fallthru
    _
  // Predicated region
  $region10: #{gru_forward.4} parent=0 // pred_check
    _
  $region11: #{gru_forward.4} parent=0 // pred_check_branch
    %15 = sbr.rel (0) target = $region13
  $region12: #{gru_forward.4} parent=0 // pred_region
    _
  $region13: #{gru_forward.4} parent=0 // pred_fallthru
    _
  %v16 = vld [vmem:[%s0] sm:$0xff]
  %v17 = vld [vmem:[%s0 + $0x8] sm:$0xff]
  %v18 = vld [vmem:[%s0 + $0x10] sm:$0xff]
  %v19 = vld [vmem:[%s0 + $0x18] sm:$0xff]
  %v20 = vld [vmem:[%s0 + $0x20] sm:$0xff]
  %v21 = vld [vmem:[%s0 + $0x28] sm:$0xff]
  %v22 = vld [vmem:[%s0 + $0x30] sm:$0xff]
  %v23 = vld [vmem:[%s0 + $0x38] sm:$0xff]
  %v24 = vld [vmem:[%s1] sm:$0xff]
  %v25 = vld [vmem:[%s1 + $0x8] sm:$0xff]
  %v26 = vld [vmem:[%s1 + $0x10] sm:$0xff]
  %v27 = vld [vmem:[%s1 + $0x18] sm:$0xff]
  %v28 = vld [vmem:[%s1 + $0x20] sm:$0xff]
  %v29 = vld [vmem:[%s1 + $0x28] sm:$0xff]
  %v30 = vld [vmem:[%s2] sm:$0x7]
  %v32 = vlaneseq
  %v33 = vshrl.u32 %v32, 7
  %v34 = vsub.s32 0, %v33
  %v35 = vrot.slane %v30, %v34
  %v36 = vlaneseq
  %v37 = vshrl.u32 %v36, 7
  %v38 = vsub.s32 1, %v37
  %v39 = vrot.slane %v30, %v38
  %v40 = vlaneseq
  %v41 = vshrl.u32 %v40, 7
  %v42 = vsub.s32 2, %v41
  %v43 = vrot.slane %v30, %v42
  %vm47 = vcmask 130048
  %v49 = vsel %vm47, %v16, 0
  %v52 = vsel %vm47, %v17, 0
  %v55 = vsel %vm47, %v18, 0
  %v58 = vsel %vm47, %v19, 0
  %v61 = vsel %vm47, %v20, 0
  %v64 = vsel %vm47, %v21, 0
  %v67 = vsel %vm47, %v22, 0
  %v70 = vsel %vm47, %v23, 0
  %72 = vmatprep.subr.mxu0 0.0
  %73 = vmatpush1.msra.mxu0 0.0
  %74 = vmatprep.subr.mxu0 0.0
  %75 = vmatpush1.msra.mxu0 0.0
  %76 = vmatprep.subr.mxu0 0.0
  %77 = vmatpush1.msra.mxu0 0.0
  %78 = vmatprep.subr.mxu0 0.0
  %79 = vmatpush1.msra.mxu0 0.0
  %80 = vmatprep.subr.mxu0 0.0
  %81 = vmatpush1.msra.mxu0 0.0
  %82 = vmatprep.subr.mxu0 0.0
  %83 = vmatpush1.msra.mxu0 0.0
  %84 = vmatprep.subr.mxu0 0.0
  %85 = vmatpush1.msra.mxu0 0.0
  %86 = vmatprep.subr.mxu0 0.0
  %87 = vmatpush1.msra.mxu0 0.0
  %88 = vmatprep.subr.mxu0 0.0
  %89 = vmatpush1.msra.mxu0 0.0
  %90 = vmatprep.subr.mxu0 0.0
  %91 = vmatpush1.msra.mxu0 0.0
  %92 = vmatprep.subr.mxu0 0.0
  %93 = vmatpush1.msra.mxu0 0.0
  %94 = vmatprep.subr.mxu0 0.0
  %95 = vmatpush1.msra.mxu0 0.0
  %96 = vmatprep.subr.mxu0 0.0
  %97 = vmatpush1.msra.mxu0 0.0
  %98 = vmatprep.subr.mxu0 0.0
  %99 = vmatpush1.msra.mxu0 0.0
  %100 = vmatprep.subr.mxu0 %v28
  %101 = vmatpush1.msra.mxu0 %v27
  %102 = vmatprep.subr.mxu0 %v25
  %103 = vmatpush1.msra.mxu0 %v24
  %104 = vmatprep.subr.mxu0 0.0
  %105 = vmatpush2.msra.mxu0 0.0
  %106 = vmatprep.subr.mxu0 0.0
  %107 = vmatpush2.msra.mxu0 0.0
  %108 = vmatprep.subr.mxu0 0.0
  %109 = vmatpush2.msra.mxu0 0.0
  %110 = vmatprep.subr.mxu0 0.0
  %111 = vmatpush2.msra.mxu0 0.0
  %112 = vmatprep.subr.mxu0 0.0
  %113 = vmatpush2.msra.mxu0 0.0
  %114 = vmatprep.subr.mxu0 0.0
  %115 = vmatpush2.msra.mxu0 0.0
  %116 = vmatprep.subr.mxu0 0.0
  %117 = vmatpush2.msra.mxu0 0.0
  %118 = vmatprep.subr.mxu0 0.0
  %119 = vmatpush2.msra.mxu0 0.0
  %120 = vmatprep.subr.mxu0 0.0
  %121 = vmatpush2.msra.mxu0 0.0
  %122 = vmatprep.subr.mxu0 0.0
  %123 = vmatpush2.msra.mxu0 0.0
  %124 = vmatprep.subr.mxu0 0.0
  %125 = vmatpush2.msra.mxu0 0.0
  %126 = vmatprep.subr.mxu0 0.0
  %127 = vmatpush2.msra.mxu0 0.0
  %128 = vmatprep.subr.mxu0 0.0
  %129 = vmatpush2.msra.mxu0 0.0
  %130 = vmatprep.subr.mxu0 0.0
  %131 = vmatpush2.msra.mxu0 0.0
  %132 = vmatprep.subr.mxu0 0.0
  %133 = vmatpush2.msra.mxu0 0.0
  %134 = vmatprep.subr.mxu0 0.0
  %135 = vmatpush2.msra.mxu0 0.0
  %136 = vmatprep.mubr.f32.mxu0 0.0
  %137 = vmatmul.mubr.f32.gmra.mxu0 %v49
  %v138 = vpop.f32.mrf.mxu0
  %v139 = vadd.f32 %v35, %v138
  %v140 = vpop.f32.mrf.mxu0
  %v141 = vadd.f32 %v39, %v140
  %142 = vmatprep.mubr.f32.mxu0 0.0
  %143 = vmatmul.mubr.f32.gmra.mxu0 %v52
  %v144 = vpop.f32.mrf.mxu0
  %v145 = vadd.f32 %v35, %v144
  %v146 = vpop.f32.mrf.mxu0
  %v147 = vadd.f32 %v39, %v146
  %148 = vmatprep.mubr.f32.mxu0 0.0
  %149 = vmatmul.mubr.f32.gmra.mxu0 %v55
  %v150 = vpop.f32.mrf.mxu0
  %v151 = vadd.f32 %v35, %v150
  %v152 = vpop.f32.mrf.mxu0
  %v153 = vadd.f32 %v39, %v152
  %154 = vmatprep.mubr.f32.mxu0 0.0
  %155 = vmatmul.mubr.f32.gmra.mxu0 %v58
  %v156 = vpop.f32.mrf.mxu0
  %v157 = vadd.f32 %v35, %v156
  %v158 = vpop.f32.mrf.mxu0
  %v159 = vadd.f32 %v39, %v158
  %160 = vmatprep.mubr.f32.mxu0 0.0
  %161 = vmatmul.mubr.f32.gmra.mxu0 %v61
  %v162 = vpop.f32.mrf.mxu0
  %v163 = vadd.f32 %v35, %v162
  %v164 = vpop.f32.mrf.mxu0
  %v165 = vadd.f32 %v39, %v164
  %166 = vmatprep.mubr.f32.mxu0 0.0
  %167 = vmatmul.mubr.f32.gmra.mxu0 %v64
  %v168 = vpop.f32.mrf.mxu0
  %v169 = vadd.f32 %v35, %v168
  %v170 = vpop.f32.mrf.mxu0
  %v171 = vadd.f32 %v39, %v170
  %172 = vmatprep.mubr.f32.mxu0 0.0
  %173 = vmatmul.mubr.f32.gmra.mxu0 %v67
  %v174 = vpop.f32.mrf.mxu0
  %v175 = vadd.f32 %v35, %v174
  %v176 = vpop.f32.mrf.mxu0
  %v177 = vadd.f32 %v39, %v176
  %178 = vmatprep.mubr.f32.mxu0 0.0
  %179 = vmatmul.mubr.f32.gmra.mxu0 %v70
  %v180 = vpop.f32.mrf.mxu0
  %v181 = vadd.f32 %v35, %v180
  %v182 = vpop.f32.mrf.mxu0
  %v183 = vadd.f32 %v39, %v182
  %184 = vdwg.mxu0
  %185 = vmatprep.subr.mxu0 0.0
  %186 = vmatpush1.msra.mxu0 0.0
  %187 = vmatprep.subr.mxu0 0.0
  %188 = vmatpush1.msra.mxu0 0.0
  %189 = vmatprep.subr.mxu0 0.0
  %190 = vmatpush1.msra.mxu0 0.0
  %191 = vmatprep.subr.mxu0 0.0
  %192 = vmatpush1.msra.mxu0 0.0
  %193 = vmatprep.subr.mxu0 0.0
  %194 = vmatpush1.msra.mxu0 0.0
  %195 = vmatprep.subr.mxu0 0.0
  %196 = vmatpush1.msra.mxu0 0.0
  %197 = vmatprep.subr.mxu0 0.0
  %198 = vmatpush1.msra.mxu0 0.0
  %199 = vmatprep.subr.mxu0 0.0
  %200 = vmatpush1.msra.mxu0 0.0
  %201 = vmatprep.subr.mxu0 0.0
  %202 = vmatpush1.msra.mxu0 0.0
  %203 = vmatprep.subr.mxu0 0.0
  %204 = vmatpush1.msra.mxu0 0.0
  %205 = vmatprep.subr.mxu0 0.0
  %206 = vmatpush1.msra.mxu0 0.0
  %207 = vmatprep.subr.mxu0 0.0
  %208 = vmatpush1.msra.mxu0 0.0
  %209 = vmatprep.subr.mxu0 0.0
  %210 = vmatpush1.msra.mxu0 0.0
  %211 = vmatprep.subr.mxu0 0.0
  %212 = vmatpush1.msra.mxu0 0.0
  %213 = vmatprep.subr.mxu0 0.0
  %214 = vmatpush1.msra.mxu0 %v29
  %215 = vmatprep.subr.mxu0 0.0
  %216 = vmatpush1.msra.mxu0 %v26
  %217 = vmatprep.subr.mxu0 0.0
  %218 = vmatpush2.msra.mxu0 0.0
  %219 = vmatprep.subr.mxu0 0.0
  %220 = vmatpush2.msra.mxu0 0.0
  %221 = vmatprep.subr.mxu0 0.0
  %222 = vmatpush2.msra.mxu0 0.0
  %223 = vmatprep.subr.mxu0 0.0
  %224 = vmatpush2.msra.mxu0 0.0
  %225 = vmatprep.subr.mxu0 0.0
  %226 = vmatpush2.msra.mxu0 0.0
  %227 = vmatprep.subr.mxu0 0.0
  %228 = vmatpush2.msra.mxu0 0.0
  %229 = vmatprep.subr.mxu0 0.0
  %230 = vmatpush2.msra.mxu0 0.0
  %231 = vmatprep.subr.mxu0 0.0
  %232 = vmatpush2.msra.mxu0 0.0
  %233 = vmatprep.subr.mxu0 0.0
  %234 = vmatpush2.msra.mxu0 0.0
  %235 = vmatprep.subr.mxu0 0.0
  %236 = vmatpush2.msra.mxu0 0.0
  %237 = vmatprep.subr.mxu0 0.0
  %238 = vmatpush2.msra.mxu0 0.0
  %239 = vmatprep.subr.mxu0 0.0
  %240 = vmatpush2.msra.mxu0 0.0
  %241 = vmatprep.subr.mxu0 0.0
  %242 = vmatpush2.msra.mxu0 0.0
  %243 = vmatprep.subr.mxu0 0.0
  %244 = vmatpush2.msra.mxu0 0.0
  %245 = vmatprep.subr.mxu0 0.0
  %246 = vmatpush2.msra.mxu0 0.0
  %247 = vmatprep.subr.mxu0 0.0
  %248 = vmatpush2.msra.mxu0 0.0
  %249 = vmatprep.mubr.f32.mxu0 0.0
  %250 = vmatmul.mubr.f32.gmra.mxu0 %v49
  %v251 = vpop.f32.mrf.mxu0
  %v252 = vadd.f32 %v43, %v251
  %v253 = vpop.f32.mrf.mxu0
  %254 = vmatprep.mubr.f32.mxu0 0.0
  %255 = vmatmul.mubr.f32.gmra.mxu0 %v52
  %v256 = vpop.f32.mrf.mxu0
  %v257 = vadd.f32 %v43, %v256
  %v258 = vpop.f32.mrf.mxu0
  %259 = vmatprep.mubr.f32.mxu0 0.0
  %260 = vmatmul.mubr.f32.gmra.mxu0 %v55
  %v261 = vpop.f32.mrf.mxu0
  %v262 = vadd.f32 %v43, %v261
  %v263 = vpop.f32.mrf.mxu0
  %264 = vmatprep.mubr.f32.mxu0 0.0
  %265 = vmatmul.mubr.f32.gmra.mxu0 %v58
  %v266 = vpop.f32.mrf.mxu0
  %v267 = vadd.f32 %v43, %v266
  %v268 = vpop.f32.mrf.mxu0
  %269 = vmatprep.mubr.f32.mxu0 0.0
  %270 = vmatmul.mubr.f32.gmra.mxu0 %v61
  %v271 = vpop.f32.mrf.mxu0
  %v272 = vadd.f32 %v43, %v271
  %v273 = vpop.f32.mrf.mxu0
  %274 = vmatprep.mubr.f32.mxu0 0.0
  %275 = vmatmul.mubr.f32.gmra.mxu0 %v64
  %v276 = vpop.f32.mrf.mxu0
  %v277 = vadd.f32 %v43, %v276
  %v278 = vpop.f32.mrf.mxu0
  %279 = vmatprep.mubr.f32.mxu0 0.0
  %280 = vmatmul.mubr.f32.gmra.mxu0 %v67
  %v281 = vpop.f32.mrf.mxu0
  %v282 = vadd.f32 %v43, %v281
  %v283 = vpop.f32.mrf.mxu0
  %284 = vmatprep.mubr.f32.mxu0 0.0
  %285 = vmatmul.mubr.f32.gmra.mxu0 %v70
  %v286 = vpop.f32.mrf.mxu0
  %v287 = vadd.f32 %v43, %v286
  %v288 = vpop.f32.mrf.mxu0
  %289 = vdwg.mxu0
  %290 = vst [vmem:[%s3] sm:$0xff] %v139
  %291 = vst [vmem:[%s3 + $0x8] sm:$0xff] %v141
  %292 = vst [vmem:[%s3 + $0x10] sm:$0xff] %v145
  %293 = vst [vmem:[%s3 + $0x18] sm:$0xff] %v147
  %294 = vst [vmem:[%s3 + $0x20] sm:$0xff] %v151
  %295 = vst [vmem:[%s3 + $0x28] sm:$0xff] %v153
  %296 = vst [vmem:[%s3 + $0x30] sm:$0xff] %v157
  %297 = vst [vmem:[%s3 + $0x38] sm:$0xff] %v159
  %298 = vst [vmem:[%s3 + $0x40] sm:$0xff] %v163
  %299 = vst [vmem:[%s3 + $0x48] sm:$0xff] %v165
  %300 = vst [vmem:[%s3 + $0x50] sm:$0xff] %v169
  %301 = vst [vmem:[%s3 + $0x58] sm:$0xff] %v171
  %302 = vst [vmem:[%s3 + $0x60] sm:$0xff] %v175
  %303 = vst [vmem:[%s3 + $0x68] sm:$0xff] %v177
  %304 = vst [vmem:[%s3 + $0x70] sm:$0xff] %v181
  %305 = vst [vmem:[%s3 + $0x78] sm:$0xff] %v183
  %306 = vst [vmem:[%s4] sm:$0xff] %v252
  %307 = vst [vmem:[%s4 + $0x8] sm:$0xff] %v257
  %308 = vst [vmem:[%s4 + $0x10] sm:$0xff] %v262
  %309 = vst [vmem:[%s4 + $0x18] sm:$0xff] %v267
  %310 = vst [vmem:[%s4 + $0x20] sm:$0xff] %v272
  %311 = vst [vmem:[%s4 + $0x28] sm:$0xff] %v277
  %312 = vst [vmem:[%s4 + $0x30] sm:$0xff] %v282
  %313 = vst [vmem:[%s4 + $0x38] sm:$0xff] %v287
  // Predicated region
  $region14: #{gru_forward.4} parent=0 // pred_check
    _
  $region15: #{gru_forward.4} parent=0 // pred_check_branch
    %315 = sbr.rel (0) target = $region17
  $region16: #{gru_forward.4} parent=0 // pred_region
    _
  $region17: #{gru_forward.4} parent=0 // pred_fallthru
    _
  // Predicated region
  $region18: #{gru_forward.4} parent=0 // pred_check
    _
  $region19: #{gru_forward.4} parent=0 // pred_check_branch
    %317 = sbr.rel (0) target = $region21
  $region20: #{gru_forward.4} parent=0 // pred_region
    _
  $region21: #{gru_forward.4} parent=0 // pred_fallthru
    _
  // Predicated region
  $region22: #{gru_forward.4} parent=0 // pred_check
    _
  $region23: #{gru_forward.4} parent=0 // pred_check_branch
    %319 = sbr.rel (0) target = $region25
  $region24: #{gru_forward.4} parent=0 // pred_region
    _
  $region25: #{gru_forward.4} parent=0 // pred_fallthru
    _
  // Predicated region
  $region26: #{gru_forward.4} parent=0 // pred_check
    _
  $region27: #{gru_forward.4} parent=0 // pred_check_branch
    %321 = sbr.rel (0) target = $region29
  $region28: #{gru_forward.4} parent=0 // pred_region
    _
  $region29: #{gru_forward.4} parent=0 // pred_fallthru
    _

// kernel: gru_forward.5
$region0: #{gru_forward.5}
  #allocation0 [shape = 'u32[]', space=smem, size = 0x4, offset = 0x4, fixed_abs, tag = 'smem constant byte address 0x4 - core index']
  #allocation1 [shape = 'u32[144,128]{1,0:T(1,128)}', space=vmem, size = 0x12000, scoped, tag = 'internal scratch']
  #allocation2 [shape = 'f32[8,128]{1,0:T(8,128)}', space=vmem, size = 0x1000, scoped, tag = 'scratch operand']
  %s0 = inlined_call_operand.vmem [shape: f32[8,8,256], index: 0, kind: input, shape index: {}]
  %s1 = inlined_call_operand.vmem [shape: f32[8,8,128], index: 1, kind: input, shape index: {}]
  %s2 = inlined_call_operand.vmem [shape: f32[8,128], index: 2, kind: input, shape index: {}]
  %s3 = inlined_call_operand.vmem [shape: f32[128,256], index: 3, kind: input, shape index: {}]
  %s4 = inlined_call_operand.vmem [shape: f32[128,128], index: 4, kind: input, shape index: {}]
  %s5 = inlined_call_operand.vmem [shape: f32[8,8,128], index: 5, kind: output, shape index: {0}]
  %s6 = inlined_call_operand.vmem [shape: f32[8,128], index: 6, kind: output, shape index: {1}]
  %7 = xla_tuple %s5, %s6
  %s8 = sld [smem:[#allocation0]]
  $region46: #{gru_forward.5} parent=0
    _
  %s10 = ssub.s32 1, %s8
  %s11 = scalar_select 0, %s10, %s8
  // Predicated region
  $region2: #{gru_forward.5} parent=0 // pred_check
    _
  $region3: #{gru_forward.5} parent=0 // pred_check_branch
    %13 = sbr.rel (0) target = $region5
  $region4: #{gru_forward.5} parent=0 // pred_region
    _
  $region5: #{gru_forward.5} parent=0 // pred_fallthru
    _
  // Predicated region
  $region6: #{gru_forward.5} parent=0 // pred_check
    _
  $region7: #{gru_forward.5} parent=0 // pred_check_branch
    %15 = sbr.rel (0) target = $region9
  $region8: #{gru_forward.5} parent=0 // pred_region
    _
  $region9: #{gru_forward.5} parent=0 // pred_fallthru
    _
  // Predicated region
  $region10: #{gru_forward.5} parent=0 // pred_check
    _
  $region11: #{gru_forward.5} parent=0 // pred_check_branch
    %17 = sbr.rel (0) target = $region13
  $region12: #{gru_forward.5} parent=0 // pred_region
    _
  $region13: #{gru_forward.5} parent=0 // pred_fallthru
    _
  // Predicated region
  $region14: #{gru_forward.5} parent=0 // pred_check
    _
  $region15: #{gru_forward.5} parent=0 // pred_check_branch
    %19 = sbr.rel (0) target = $region17
  $region16: #{gru_forward.5} parent=0 // pred_region
    _
  $region17: #{gru_forward.5} parent=0 // pred_fallthru
    _
  // Predicated region
  $region18: #{gru_forward.5} parent=0 // pred_check
    _
  $region19: #{gru_forward.5} parent=0 // pred_check_branch
    %21 = sbr.rel (0) target = $region21
  $region20: #{gru_forward.5} parent=0 // pred_region
    _
  $region21: #{gru_forward.5} parent=0 // pred_fallthru
    _
  %p22 = scmp.eq.s32.totalorder 0, 0
  // Predicated region
  $region22: #{gru_forward.5} parent=0 // pred_check
    %p23 = pneg %p22
  $region23: #{gru_forward.5} parent=0 // pred_check_branch
    %25 = sbr.rel (%p23) target = $region25
  $region24: #{gru_forward.5} parent=0 // pred_region
    %v26 = vld [vmem:[%s2] sm:$0xff]
    %27 = vst [vmem:[#allocation2] sm:$0xff] %v26
  $region25: #{gru_forward.5} parent=0 // pred_fallthru
    _
  %v28 = vld [vmem:[%s3] sm:$0xff]
  %v29 = vld [vmem:[%s3 + $0x8] sm:$0xff]
  %v30 = vld [vmem:[%s3 + $0x10] sm:$0xff]
  %v31 = vld [vmem:[%s3 + $0x18] sm:$0xff]
  %v32 = vld [vmem:[%s3 + $0x20] sm:$0xff]
  %v33 = vld [vmem:[%s3 + $0x28] sm:$0xff]
  %v34 = vld [vmem:[%s3 + $0x30] sm:$0xff]
  %v35 = vld [vmem:[%s3 + $0x38] sm:$0xff]
  %v36 = vld [vmem:[%s3 + $0x40] sm:$0xff]
  %v37 = vld [vmem:[%s3 + $0x48] sm:$0xff]
  %v38 = vld [vmem:[%s3 + $0x50] sm:$0xff]
  %v39 = vld [vmem:[%s3 + $0x58] sm:$0xff]
  %v40 = vld [vmem:[%s3 + $0x60] sm:$0xff]
  %v41 = vld [vmem:[%s3 + $0x68] sm:$0xff]
  %v42 = vld [vmem:[%s3 + $0x70] sm:$0xff]
  %v43 = vld [vmem:[%s3 + $0x78] sm:$0xff]
  %v44 = vld [vmem:[%s3 + $0x80] sm:$0xff]
  %v45 = vld [vmem:[%s3 + $0x88] sm:$0xff]
  %v46 = vld [vmem:[%s3 + $0x90] sm:$0xff]
  %v47 = vld [vmem:[%s3 + $0x98] sm:$0xff]
  %v48 = vld [vmem:[%s3 + $0xa0] sm:$0xff]
  %v49 = vld [vmem:[%s3 + $0xa8] sm:$0xff]
  %v50 = vld [vmem:[%s3 + $0xb0] sm:$0xff]
  %v51 = vld [vmem:[%s3 + $0xb8] sm:$0xff]
  %v52 = vld [vmem:[%s3 + $0xc0] sm:$0xff]
  %v53 = vld [vmem:[%s3 + $0xc8] sm:$0xff]
  %v54 = vld [vmem:[%s3 + $0xd0] sm:$0xff]
  %v55 = vld [vmem:[%s3 + $0xd8] sm:$0xff]
  %v56 = vld [vmem:[%s3 + $0xe0] sm:$0xff]
  %v57 = vld [vmem:[%s3 + $0xe8] sm:$0xff]
  %v58 = vld [vmem:[%s3 + $0xf0] sm:$0xff]
  %v59 = vld [vmem:[%s3 + $0xf8] sm:$0xff]
  %v60 = vld [vmem:[%s4] sm:$0xff]
  %v61 = vld [vmem:[%s4 + $0x8] sm:$0xff]
  %v62 = vld [vmem:[%s4 + $0x10] sm:$0xff]
  %v63 = vld [vmem:[%s4 + $0x18] sm:$0xff]
  %v64 = vld [vmem:[%s4 + $0x20] sm:$0xff]
  %v65 = vld [vmem:[%s4 + $0x28] sm:$0xff]
  %v66 = vld [vmem:[%s4 + $0x30] sm:$0xff]
  %v67 = vld [vmem:[%s4 + $0x38] sm:$0xff]
  %v68 = vld [vmem:[%s4 + $0x40] sm:$0xff]
  %v69 = vld [vmem:[%s4 + $0x48] sm:$0xff]
  %v70 = vld [vmem:[%s4 + $0x50] sm:$0xff]
  %v71 = vld [vmem:[%s4 + $0x58] sm:$0xff]
  %v72 = vld [vmem:[%s4 + $0x60] sm:$0xff]
  %v73 = vld [vmem:[%s4 + $0x68] sm:$0xff]
  %v74 = vld [vmem:[%s4 + $0x70] sm:$0xff]
  %v75 = vld [vmem:[%s4 + $0x78] sm:$0xff]
  %s76 = smul.u32 0, 8
  %v77 = vld [vmem:[#allocation2] sm:$0xff]
  %v78 = vld [vmem:[%s0] sm:$0xff]
  %v79 = vld [vmem:[%s0 + $0x8] sm:$0xff]
  %80 = vmatprep.subr.mxu0 %v59
  %81 = vmatpush1.msra.mxu0 %v58
  %82 = vmatprep.subr.mxu0 %v57
  %83 = vmatpush1.msra.mxu0 %v56
  %84 = vmatprep.subr.mxu0 %v55
  %85 = vmatpush1.msra.mxu0 %v54
  %86 = vmatprep.subr.mxu0 %v53
  %87 = vmatpush1.msra.mxu0 %v52
  %88 = vmatprep.subr.mxu0 %v51
  %89 = vmatpush1.msra.mxu0 %v50
  %90 = vmatprep.subr.mxu0 %v49
  %91 = vmatpush1.msra.mxu0 %v48
  %92 = vmatprep.subr.mxu0 %v47
  %93 = vmatpush1.msra.mxu0 %v46
  %94 = vmatprep.subr.mxu0 %v45
  %95 = vmatpush1.msra.mxu0 %v44
  %96 = vmatprep.subr.mxu0 %v43
  %97 = vmatpush1.msra.mxu0 %v42
  %98 = vmatprep.subr.mxu0 %v41
  %99 = vmatpush1.msra.mxu0 %v40
  %100 = vmatprep.subr.mxu0 %v39
  %101 = vmatpush1.msra.mxu0 %v38
  %102 = vmatprep.subr.mxu0 %v37
  %103 = vmatpush1.msra.mxu0 %v36
  %104 = vmatprep.subr.mxu0 %v35
  %105 = vmatpush1.msra.mxu0 %v34
  %106 = vmatprep.subr.mxu0 %v33
  %107 = vmatpush1.msra.mxu0 %v32
  %108 = vmatprep.subr.mxu0 %v31
  %109 = vmatpush1.msra.mxu0 %v30
  %110 = vmatprep.subr.mxu0 %v29
  %111 = vmatpush1.msra.mxu0 %v28
  %112 = vmatprep.subr.mxu0 0.0
  %113 = vmatpush2.msra.mxu0 0.0
  %114 = vmatprep.subr.mxu0 0.0
  %115 = vmatpush2.msra.mxu0 0.0
  %116 = vmatprep.subr.mxu0 0.0
  %117 = vmatpush2.msra.mxu0 0.0
  %118 = vmatprep.subr.mxu0 0.0
  %119 = vmatpush2.msra.mxu0 0.0
  %120 = vmatprep.subr.mxu0 0.0
  %121 = vmatpush2.msra.mxu0 0.0
  %122 = vmatprep.subr.mxu0 0.0
  %123 = vmatpush2.msra.mxu0 0.0
  %124 = vmatprep.subr.mxu0 0.0
  %125 = vmatpush2.msra.mxu0 0.0
  %126 = vmatprep.subr.mxu0 0.0
  %127 = vmatpush2.msra.mxu0 0.0
  %128 = vmatprep.subr.mxu0 0.0
  %129 = vmatpush2.msra.mxu0 0.0
  %130 = vmatprep.subr.mxu0 0.0
  %131 = vmatpush2.msra.mxu0 0.0
  %132 = vmatprep.subr.mxu0 0.0
  %133 = vmatpush2.msra.mxu0 0.0
  %134 = vmatprep.subr.mxu0 0.0
  %135 = vmatpush2.msra.mxu0 0.0
  %136 = vmatprep.subr.mxu0 0.0
  %137 = vmatpush2.msra.mxu0 0.0
  %138 = vmatprep.subr.mxu0 0.0
  %139 = vmatpush2.msra.mxu0 0.0
  %140 = vmatprep.subr.mxu0 0.0
  %141 = vmatpush2.msra.mxu0 0.0
  %142 = vmatprep.subr.mxu0 0.0
  %143 = vmatpush2.msra.mxu0 0.0
  %144 = vmatprep.mubr.f32.mxu0 0.0
  %145 = vmatmul.mubr.f32.gmra.mxu0 %v77
  %v146 = vpop.f32.mrf.mxu0
  %v147 = vadd.f32 0.0, %v146
  %v148 = vpop.f32.mrf.mxu0
  %v149 = vadd.f32 0.0, %v148
  %150 = vdwg.mxu0
  %v151 = vadd.f32 %v78, %v147
  %v152 = vadd.f32 %v79, %v149
  %v153 = vxor.u32 %v151, 2147483648
  %v154 = vxor.u32 %v152, 2147483648
  %v155 = vmul.f32 %v153, 1.442695
  %v156 = vpow.pop %v155
  %v157 = vmul.f32 %v154, 1.442695
  %v158 = vpow.pop %v157
  %v159 = vadd.f32 %v156, 1.0
  %v160 = vadd.f32 %v158, 1.0
  %v161 = vrcp.pop %v159
  %v162 = vmul.f32 1.0, %v161
  %v163 = vrcp.pop %v160
  %v164 = vmul.f32 1.0, %v163
  %v165 = vld [vmem:[%s1] sm:$0xff]
  %v166 = vmul.f32 %v77, %v162
  %167 = vmatprep.subr.mxu0 0.0
  %168 = vmatpush1.msra.mxu0 %v75
  %169 = vmatprep.subr.mxu0 0.0
  %170 = vmatpush1.msra.mxu0 %v74
  %171 = vmatprep.subr.mxu0 0.0
  %172 = vmatpush1.msra.mxu0 %v73
  %173 = vmatprep.subr.mxu0 0.0
  %174 = vmatpush1.msra.mxu0 %v72
  %175 = vmatprep.subr.mxu0 0.0
  %176 = vmatpush1.msra.mxu0 %v71
  %177 = vmatprep.subr.mxu0 0.0
  %178 = vmatpush1.msra.mxu0 %v70
  %179 = vmatprep.subr.mxu0 0.0
  %180 = vmatpush1.msra.mxu0 %v69
  %181 = vmatprep.subr.mxu0 0.0
  %182 = vmatpush1.msra.mxu0 %v68
  %183 = vmatprep.subr.mxu0 0.0
  %184 = vmatpush1.msra.mxu0 %v67
  %185 = vmatprep.subr.mxu0 0.0
  %186 = vmatpush1.msra.mxu0 %v66
  %187 = vmatprep.subr.mxu0 0.0
  %188 = vmatpush1.msra.mxu0 %v65
  %189 = vmatprep.subr.mxu0 0.0
  %190 = vmatpush1.msra.mxu0 %v64
  %191 = vmatprep.subr.mxu0 0.0
  %192 = vmatpush1.msra.mxu0 %v63
  %193 = vmatprep.subr.mxu0 0.0
  %194 = vmatpush1.msra.mxu0 %v62
  %195 = vmatprep.subr.mxu0 0.0
  %196 = vmatpush1.msra.mxu0 %v61
  %197 = vmatprep.subr.mxu0 0.0
  %198 = vmatpush1.msra.mxu0 %v60
  %199 = vmatprep.subr.mxu0 0.0
  %200 = vmatpush2.msra.mxu0 0.0
  %201 = vmatprep.subr.mxu0 0.0
  %202 = vmatpush2.msra.mxu0 0.0
  %203 = vmatprep.subr.mxu0 0.0
  %204 = vmatpush2.msra.mxu0 0.0
  %205 = vmatprep.subr.mxu0 0.0
  %206 = vmatpush2.msra.mxu0 0.0
  %207 = vmatprep.subr.mxu0 0.0
  %208 = vmatpush2.msra.mxu0 0.0
  %209 = vmatprep.subr.mxu0 0.0
  %210 = vmatpush2.msra.mxu0 0.0
  %211 = vmatprep.subr.mxu0 0.0
  %212 = vmatpush2.msra.mxu0 0.0
  %213 = vmatprep.subr.mxu0 0.0
  %214 = vmatpush2.msra.mxu0 0.0
  %215 = vmatprep.subr.mxu0 0.0
  %216 = vmatpush2.msra.mxu0 0.0
  %217 = vmatprep.subr.mxu0 0.0
  %218 = vmatpush2.msra.mxu0 0.0
  %219 = vmatprep.subr.mxu0 0.0
  %220 = vmatpush2.msra.mxu0 0.0
  %221 = vmatprep.subr.mxu0 0.0
  %222 = vmatpush2.msra.mxu0 0.0
  %223 = vmatprep.subr.mxu0 0.0
  %224 = vmatpush2.msra.mxu0 0.0
  %225 = vmatprep.subr.mxu0 0.0
  %226 = vmatpush2.msra.mxu0 0.0
  %227 = vmatprep.subr.mxu0 0.0
  %228 = vmatpush2.msra.mxu0 0.0
  %229 = vmatprep.subr.mxu0 0.0
  %230 = vmatpush2.msra.mxu0 0.0
  %231 = vmatprep.mubr.f32.mxu0 0.0
  %232 = vmatmul.mubr.f32.gmra.mxu0 %v166
  %v233 = vpop.f32.mrf.mxu0
  %v234 = vadd.f32 0.0, %v233
  %v235 = vpop.f32.mrf.mxu0
  %236 = vdwg.mxu0
  %v237 = vadd.f32 %v165, %v234
  %v238 = vtanh.pop %v237
  %v239 = vmul.f32 %v164, %v77
  %v240 = vsub.f32 1.0, %v164
  %v241 = vmul.f32 %v240, %v238
  %v242 = vadd.f32 %v239, %v241
  %p243 = scmp.lt.s32.totalorder %s76, 8
  %s244 = scalar_select %p243, 1, 0
  %v245 = vstv %s244
  %vm246 = vcmp.eq.s32.totalorder %v245, 1
  %v247 = vsel %vm246, %v242, %v77
  %248 = vst [vmem:[%s5] sm:$0xff] %v247
  %s249 = scalar_lea.vmem %s0, 16
  %v250 = vld [vmem:[%s249] sm:$0xff]
  %v251 = vld [vmem:[%s249 + $0x8] sm:$0xff]
  %252 = vmatprep.subr.mxu0 %v59
  %253 = vmatpush1.msra.mxu0 %v58
  %254 = vmatprep.subr.mxu0 %v57
  %255 = vmatpush1.msra.mxu0 %v56
  %256 = vmatprep.subr.mxu0 %v55
  %257 = vmatpush1.msra.mxu0 %v54
  %258 = vmatprep.subr.mxu0 %v53
  %259 = vmatpush1.msra.mxu0 %v52
  %260 = vmatprep.subr.mxu0 %v51
  %261 = vmatpush1.msra.mxu0 %v50
  %262 = vmatprep.subr.mxu0 %v49
  %263 = vmatpush1.msra.mxu0 %v48
  %264 = vmatprep.subr.mxu0 %v47
  %265 = vmatpush1.msra.mxu0 %v46
  %266 = vmatprep.subr.mxu0 %v45
  %267 = vmatpush1.msra.mxu0 %v44
  %268 = vmatprep.subr.mxu0 %v43
  %269 = vmatpush1.msra.mxu0 %v42
  %270 = vmatprep.subr.mxu0 %v41
  %271 = vmatpush1.msra.mxu0 %v40
  %272 = vmatprep.subr.mxu0 %v39
  %273 = vmatpush1.msra.mxu0 %v38
  %274 = vmatprep.subr.mxu0 %v37
  %275 = vmatpush1.msra.mxu0 %v36
  %276 = vmatprep.subr.mxu0 %v35
  %277 = vmatpush1.msra.mxu0 %v34
  %278 = vmatprep.subr.mxu0 %v33
  %279 = vmatpush1.msra.mxu0 %v32
  %280 = vmatprep.subr.mxu0 %v31
  %281 = vmatpush1.msra.mxu0 %v30
  %282 = vmatprep.subr.mxu0 %v29
  %283 = vmatpush1.msra.mxu0 %v28
  %284 = vmatprep.subr.mxu0 0.0
  %285 = vmatpush2.msra.mxu0 0.0
  %286 = vmatprep.subr.mxu0 0.0
  %287 = vmatpush2.msra.mxu0 0.0
  %288 = vmatprep.subr.mxu0 0.0
  %289 = vmatpush2.msra.mxu0 0.0
  %290 = vmatprep.subr.mxu0 0.0
  %291 = vmatpush2.msra.mxu0 0.0
  %292 = vmatprep.subr.mxu0 0.0
  %293 = vmatpush2.msra.mxu0 0.0
  %294 = vmatprep.subr.mxu0 0.0
  %295 = vmatpush2.msra.mxu0 0.0
  %296 = vmatprep.subr.mxu0 0.0
  %297 = vmatpush2.msra.mxu0 0.0
  %298 = vmatprep.subr.mxu0 0.0
  %299 = vmatpush2.msra.mxu0 0.0
  %300 = vmatprep.subr.mxu0 0.0
  %301 = vmatpush2.msra.mxu0 0.0
  %302 = vmatprep.subr.mxu0 0.0
  %303 = vmatpush2.msra.mxu0 0.0
  %304 = vmatprep.subr.mxu0 0.0
  %305 = vmatpush2.msra.mxu0 0.0
  %306 = vmatprep.subr.mxu0 0.0
  %307 = vmatpush2.msra.mxu0 0.0
  %308 = vmatprep.subr.mxu0 0.0
  %309 = vmatpush2.msra.mxu0 0.0
  %310 = vmatprep.subr.mxu0 0.0
  %311 = vmatpush2.msra.mxu0 0.0
  %312 = vmatprep.subr.mxu0 0.0
  %313 = vmatpush2.msra.mxu0 0.0
  %314 = vmatprep.subr.mxu0 0.0
  %315 = vmatpush2.msra.mxu0 0.0
  %316 = vmatprep.mubr.f32.mxu0 0.0
  %317 = vmatmul.mubr.f32.gmra.mxu0 %v247
  %v318 = vpop.f32.mrf.mxu0
  %v319 = vadd.f32 0.0, %v318
  %v320 = vpop.f32.mrf.mxu0
  %v321 = vadd.f32 0.0, %v320
  %322 = vdwg.mxu0
  %v323 = vadd.f32 %v250, %v319
  %v324 = vadd.f32 %v251, %v321
  %v325 = vxor.u32 %v323, 2147483648
  %v326 = vxor.u32 %v324, 2147483648
  %v327 = vmul.f32 %v325, 1.442695
  %v328 = vpow.pop %v327
  %v329 = vmul.f32 %v326, 1.442695
  %v330 = vpow.pop %v329
  %v331 = vadd.f32 %v328, 1.0
  %v332 = vadd.f32 %v330, 1.0
  %v333 = vrcp.pop %v331
  %v334 = vmul.f32 1.0, %v333
  %v335 = vrcp.pop %v332
  %v336 = vmul.f32 1.0, %v335
  %s337 = scalar_lea.vmem %s1, 8
  %v338 = vld [vmem:[%s337] sm:$0xff]
  %v339 = vmul.f32 %v247, %v334
  %340 = vmatprep.subr.mxu0 0.0
  %341 = vmatpush1.msra.mxu0 %v75
  %342 = vmatprep.subr.mxu0 0.0
  %343 = vmatpush1.msra.mxu0 %v74
  %344 = vmatprep.subr.mxu0 0.0
  %345 = vmatpush1.msra.mxu0 %v73
  %346 = vmatprep.subr.mxu0 0.0
  %347 = vmatpush1.msra.mxu0 %v72
  %348 = vmatprep.subr.mxu0 0.0
  %349 = vmatpush1.msra.mxu0 %v71
  %350 = vmatprep.subr.mxu0 0.0
  %351 = vmatpush1.msra.mxu0 %v70
  %352 = vmatprep.subr.mxu0 0.0
  %353 = vmatpush1.msra.mxu0 %v69
  %354 = vmatprep.subr.mxu0 0.0
  %355 = vmatpush1.msra.mxu0 %v68
  %356 = vmatprep.subr.mxu0 0.0
  %357 = vmatpush1.msra.mxu0 %v67
  %358 = vmatprep.subr.mxu0 0.0
  %359 = vmatpush1.msra.mxu0 %v66
  %360 = vmatprep.subr.mxu0 0.0
  %361 = vmatpush1.msra.mxu0 %v65
  %362 = vmatprep.subr.mxu0 0.0
  %363 = vmatpush1.msra.mxu0 %v64
  %364 = vmatprep.subr.mxu0 0.0
  %365 = vmatpush1.msra.mxu0 %v63
  %366 = vmatprep.subr.mxu0 0.0
  %367 = vmatpush1.msra.mxu0 %v62
  %368 = vmatprep.subr.mxu0 0.0
  %369 = vmatpush1.msra.mxu0 %v61
  %370 = vmatprep.subr.mxu0 0.0
  %371 = vmatpush1.msra.mxu0 %v60
  %372 = vmatprep.subr.mxu0 0.0
  %373 = vmatpush2.msra.mxu0 0.0
  %374 = vmatprep.subr.mxu0 0.0
  %375 = vmatpush2.msra.mxu0 0.0
  %376 = vmatprep.subr.mxu0 0.0
  %377 = vmatpush2.msra.mxu0 0.0
  %378 = vmatprep.subr.mxu0 0.0
  %379 = vmatpush2.msra.mxu0 0.0
  %380 = vmatprep.subr.mxu0 0.0
  %381 = vmatpush2.msra.mxu0 0.0
  %382 = vmatprep.subr.mxu0 0.0
  %383 = vmatpush2.msra.mxu0 0.0
  %384 = vmatprep.subr.mxu0 0.0
  %385 = vmatpush2.msra.mxu0 0.0
  %386 = vmatprep.subr.mxu0 0.0
  %387 = vmatpush2.msra.mxu0 0.0
  %388 = vmatprep.subr.mxu0 0.0
  %389 = vmatpush2.msra.mxu0 0.0
  %390 = vmatprep.subr.mxu0 0.0
  %391 = vmatpush2.msra.mxu0 0.0
  %392 = vmatprep.subr.mxu0 0.0
  %393 = vmatpush2.msra.mxu0 0.0
  %394 = vmatprep.subr.mxu0 0.0
  %395 = vmatpush2.msra.mxu0 0.0
  %396 = vmatprep.subr.mxu0 0.0
  %397 = vmatpush2.msra.mxu0 0.0
  %398 = vmatprep.subr.mxu0 0.0
  %399 = vmatpush2.msra.mxu0 0.0
  %400 = vmatprep.subr.mxu0 0.0
  %401 = vmatpush2.msra.mxu0 0.0
  %402 = vmatprep.subr.mxu0 0.0
  %403 = vmatpush2.msra.mxu0 0.0
  %404 = vmatprep.mubr.f32.mxu0 0.0
  %405 = vmatmul.mubr.f32.gmra.mxu0 %v339
  %v406 = vpop.f32.mrf.mxu0
  %v407 = vadd.f32 0.0, %v406
  %v408 = vpop.f32.mrf.mxu0
  %409 = vdwg.mxu0
  %v410 = vadd.f32 %v338, %v407
  %v411 = vtanh.pop %v410
  %v412 = vmul.f32 %v336, %v247
  %v413 = vsub.f32 1.0, %v336
  %v414 = vmul.f32 %v413, %v411
  %v415 = vadd.f32 %v412, %v414
  %s416 = sadd.s32 %s76, 1
  %p417 = scmp.lt.s32.totalorder %s416, 8
  %s418 = scalar_select %p417, 1, 0
  %v419 = vstv %s418
  %vm420 = vcmp.eq.s32.totalorder %v419, 1
  %v421 = vsel %vm420, %v415, %v247
  %s422 = scalar_lea.vmem %s5, 8
  %423 = vst [vmem:[%s422] sm:$0xff] %v421
  %s424 = scalar_lea.vmem %s0, 32
  %v425 = vld [vmem:[%s424] sm:$0xff]
  %v426 = vld [vmem:[%s424 + $0x8] sm:$0xff]
  %427 = vmatprep.subr.mxu0 %v59
  %428 = vmatpush1.msra.mxu0 %v58
  %429 = vmatprep.subr.mxu0 %v57
  %430 = vmatpush1.msra.mxu0 %v56
  %431 = vmatprep.subr.mxu0 %v55
  %432 = vmatpush1.msra.mxu0 %v54
  %433 = vmatprep.subr.mxu0 %v53
  %434 = vmatpush1.msra.mxu0 %v52
  %435 = vmatprep.subr.mxu0 %v51
  %436 = vmatpush1.msra.mxu0 %v50
  %437 = vmatprep.subr.mxu0 %v49
  %438 = vmatpush1.msra.mxu0 %v48
  %439 = vmatprep.subr.mxu0 %v47
  %440 = vmatpush1.msra.mxu0 %v46
  %441 = vmatprep.subr.mxu0 %v45
  %442 = vmatpush1.msra.mxu0 %v44
  %443 = vmatprep.subr.mxu0 %v43
  %444 = vmatpush1.msra.mxu0 %v42
  %445 = vmatprep.subr.mxu0 %v41
  %446 = vmatpush1.msra.mxu0 %v40
  %447 = vmatprep.subr.mxu0 %v39
  %448 = vmatpush1.msra.mxu0 %v38
  %449 = vmatprep.subr.mxu0 %v37
  %450 = vmatpush1.msra.mxu0 %v36
  %451 = vmatprep.subr.mxu0 %v35
  %452 = vmatpush1.msra.mxu0 %v34
  %453 = vmatprep.subr.mxu0 %v33
  %454 = vmatpush1.msra.mxu0 %v32
  %455 = vmatprep.subr.mxu0 %v31
  %456 = vmatpush1.msra.mxu0 %v30
  %457 = vmatprep.subr.mxu0 %v29
  %458 = vmatpush1.msra.mxu0 %v28
  %459 = vmatprep.subr.mxu0 0.0
  %460 = vmatpush2.msra.mxu0 0.0
  %461 = vmatprep.subr.mxu0 0.0
  %462 = vmatpush2.msra.mxu0 0.0
  %463 = vmatprep.subr.mxu0 0.0
  %464 = vmatpush2.msra.mxu0 0.0
  %465 = vmatprep.subr.mxu0 0.0
  %466 = vmatpush2.msra.mxu0 0.0
  %467 = vmatprep.subr.mxu0 0.0
  %468 = vmatpush2.msra.mxu0 0.0
  %469 = vmatprep.subr.mxu0 0.0
  %470 = vmatpush2.msra.mxu0 0.0
  %471 = vmatprep.subr.mxu0 0.0
  %472 = vmatpush2.msra.mxu0 0.0
  %473 = vmatprep.subr.mxu0 0.0
  %474 = vmatpush2.msra.mxu0 0.0
  %475 = vmatprep.subr.mxu0 0.0
  %476 = vmatpush2.msra.mxu0 0.0
  %477 = vmatprep.subr.mxu0 0.0
  %478 = vmatpush2.msra.mxu0 0.0
  %479 = vmatprep.subr.mxu0 0.0
  %480 = vmatpush2.msra.mxu0 0.0
  %481 = vmatprep.subr.mxu0 0.0
  %482 = vmatpush2.msra.mxu0 0.0
  %483 = vmatprep.subr.mxu0 0.0
  %484 = vmatpush2.msra.mxu0 0.0
  %485 = vmatprep.subr.mxu0 0.0
  %486 = vmatpush2.msra.mxu0 0.0
  %487 = vmatprep.subr.mxu0 0.0
  %488 = vmatpush2.msra.mxu0 0.0
  %489 = vmatprep.subr.mxu0 0.0
  %490 = vmatpush2.msra.mxu0 0.0
  %491 = vmatprep.mubr.f32.mxu0 0.0
  %492 = vmatmul.mubr.f32.gmra.mxu0 %v421
  %v493 = vpop.f32.mrf.mxu0
  %v494 = vadd.f32 0.0, %v493
  %v495 = vpop.f32.mrf.mxu0
  %v496 = vadd.f32 0.0, %v495
  %497 = vdwg.mxu0
  %v498 = vadd.f32 %v425, %v494
  %v499 = vadd.f32 %v426, %v496
  %v500 = vxor.u32 %v498, 2147483648
  %v501 = vxor.u32 %v499, 2147483648
  %v502 = vmul.f32 %v500, 1.442695
  %v503 = vpow.pop %v502
  %v504 = vmul.f32 %v501, 1.442695
  %v505 = vpow.pop %v504
  %v506 = vadd.f32 %v503, 1.0
  %v507 = vadd.f32 %v505, 1.0
  %v508 = vrcp.pop %v506
  %v509 = vmul.f32 1.0, %v508
  %v510 = vrcp.pop %v507
  %v511 = vmul.f32 1.0, %v510
  %s512 = scalar_lea.vmem %s1, 16
  %v513 = vld [vmem:[%s512] sm:$0xff]
  %v514 = vmul.f32 %v421, %v509
  %515 = vmatprep.subr.mxu0 0.0
  %516 = vmatpush1.msra.mxu0 %v75
  %517 = vmatprep.subr.mxu0 0.0
  %518 = vmatpush1.msra.mxu0 %v74
  %519 = vmatprep.subr.mxu0 0.0
  %520 = vmatpush1.msra.mxu0 %v73
  %521 = vmatprep.subr.mxu0 0.0
  %522 = vmatpush1.msra.mxu0 %v72
  %523 = vmatprep.subr.mxu0 0.0
  %524 = vmatpush1.msra.mxu0 %v71
  %525 = vmatprep.subr.mxu0 0.0
  %526 = vmatpush1.msra.mxu0 %v70
  %527 = vmatprep.subr.mxu0 0.0
  %528 = vmatpush1.msra.mxu0 %v69
  %529 = vmatprep.subr.mxu0 0.0
  %530 = vmatpush1.msra.mxu0 %v68
  %531 = vmatprep.subr.mxu0 0.0
  %532 = vmatpush1.msra.mxu0 %v67
  %533 = vmatprep.subr.mxu0 0.0
  %534 = vmatpush1.msra.mxu0 %v66
  %535 = vmatprep.subr.mxu0 0.0
  %536 = vmatpush1.msra.mxu0 %v65
  %537 = vmatprep.subr.mxu0 0.0
  %538 = vmatpush1.msra.mxu0 %v64
  %539 = vmatprep.subr.mxu0 0.0
  %540 = vmatpush1.msra.mxu0 %v63
  %541 = vmatprep.subr.mxu0 0.0
  %542 = vmatpush1.msra.mxu0 %v62
  %543 = vmatprep.subr.mxu0 0.0
  %544 = vmatpush1.msra.mxu0 %v61
  %545 = vmatprep.subr.mxu0 0.0
  %546 = vmatpush1.msra.mxu0 %v60
  %547 = vmatprep.subr.mxu0 0.0
  %548 = vmatpush2.msra.mxu0 0.0
  %549 = vmatprep.subr.mxu0 0.0
  %550 = vmatpush2.msra.mxu0 0.0
  %551 = vmatprep.subr.mxu0 0.0
  %552 = vmatpush2.msra.mxu0 0.0
  %553 = vmatprep.subr.mxu0 0.0
  %554 = vmatpush2.msra.mxu0 0.0
  %555 = vmatprep.subr.mxu0 0.0
  %556 = vmatpush2.msra.mxu0 0.0
  %557 = vmatprep.subr.mxu0 0.0
  %558 = vmatpush2.msra.mxu0 0.0
  %559 = vmatprep.subr.mxu0 0.0
  %560 = vmatpush2.msra.mxu0 0.0
  %561 = vmatprep.subr.mxu0 0.0
  %562 = vmatpush2.msra.mxu0 0.0
  %563 = vmatprep.subr.mxu0 0.0
  %564 = vmatpush2.msra.mxu0 0.0
  %565 = vmatprep.subr.mxu0 0.0
  %566 = vmatpush2.msra.mxu0 0.0
  %567 = vmatprep.subr.mxu0 0.0
  %568 = vmatpush2.msra.mxu0 0.0
  %569 = vmatprep.subr.mxu0 0.0
  %570 = vmatpush2.msra.mxu0 0.0
  %571 = vmatprep.subr.mxu0 0.0
  %572 = vmatpush2.msra.mxu0 0.0
  %573 = vmatprep.subr.mxu0 0.0
  %574 = vmatpush2.msra.mxu0 0.0
  %575 = vmatprep.subr.mxu0 0.0
  %576 = vmatpush2.msra.mxu0 0.0
  %577 = vmatprep.subr.mxu0 0.0
  %578 = vmatpush2.msra.mxu0 0.0
  %579 = vmatprep.mubr.f32.mxu0 0.0
  %580 = vmatmul.mubr.f32.gmra.mxu0 %v514
  %v581 = vpop.f32.mrf.mxu0
  %v582 = vadd.f32 0.0, %v581
  %v583 = vpop.f32.mrf.mxu0
  %584 = vdwg.mxu0
  %v585 = vadd.f32 %v513, %v582
  %v586 = vtanh.pop %v585
  %v587 = vmul.f32 %v511, %v421
  %v588 = vsub.f32 1.0, %v511
  %v589 = vmul.f32 %v588, %v586
  %v590 = vadd.f32 %v587, %v589
  %s591 = sadd.s32 %s76, 2
  %p592 = scmp.lt.s32.totalorder %s591, 8
  %s593 = scalar_select %p592, 1, 0
  %v594 = vstv %s593
  %vm595 = vcmp.eq.s32.totalorder %v594, 1
  %v596 = vsel %vm595, %v590, %v421
  %s597 = scalar_lea.vmem %s5, 16
  %598 = vst [vmem:[%s597] sm:$0xff] %v596
  %s599 = scalar_lea.vmem %s0, 48
  %v600 = vld [vmem:[%s599] sm:$0xff]
  %v601 = vld [vmem:[%s599 + $0x8] sm:$0xff]
  %602 = vmatprep.subr.mxu0 %v59
  %603 = vmatpush1.msra.mxu0 %v58
  %604 = vmatprep.subr.mxu0 %v57
  %605 = vmatpush1.msra.mxu0 %v56
  %606 = vmatprep.subr.mxu0 %v55
  %607 = vmatpush1.msra.mxu0 %v54
  %608 = vmatprep.subr.mxu0 %v53
  %609 = vmatpush1.msra.mxu0 %v52
  %610 = vmatprep.subr.mxu0 %v51
  %611 = vmatpush1.msra.mxu0 %v50
  %612 = vmatprep.subr.mxu0 %v49
  %613 = vmatpush1.msra.mxu0 %v48
  %614 = vmatprep.subr.mxu0 %v47
  %615 = vmatpush1.msra.mxu0 %v46
  %616 = vmatprep.subr.mxu0 %v45
  %617 = vmatpush1.msra.mxu0 %v44
  %618 = vmatprep.subr.mxu0 %v43
  %619 = vmatpush1.msra.mxu0 %v42
  %620 = vmatprep.subr.mxu0 %v41
  %621 = vmatpush1.msra.mxu0 %v40
  %622 = vmatprep.subr.mxu0 %v39
  %623 = vmatpush1.msra.mxu0 %v38
  %624 = vmatprep.subr.mxu0 %v37
  %625 = vmatpush1.msra.mxu0 %v36
  %626 = vmatprep.subr.mxu0 %v35
  %627 = vmatpush1.msra.mxu0 %v34
  %628 = vmatprep.subr.mxu0 %v33
  %629 = vmatpush1.msra.mxu0 %v32
  %630 = vmatprep.subr.mxu0 %v31
  %631 = vmatpush1.msra.mxu0 %v30
  %632 = vmatprep.subr.mxu0 %v29
  %633 = vmatpush1.msra.mxu0 %v28
  %634 = vmatprep.subr.mxu0 0.0
  %635 = vmatpush2.msra.mxu0 0.0
  %636 = vmatprep.subr.mxu0 0.0
  %637 = vmatpush2.msra.mxu0 0.0
  %638 = vmatprep.subr.mxu0 0.0
  %639 = vmatpush2.msra.mxu0 0.0
  %640 = vmatprep.subr.mxu0 0.0
  %641 = vmatpush2.msra.mxu0 0.0
  %642 = vmatprep.subr.mxu0 0.0
  %643 = vmatpush2.msra.mxu0 0.0
  %644 = vmatprep.subr.mxu0 0.0
  %645 = vmatpush2.msra.mxu0 0.0
  %646 = vmatprep.subr.mxu0 0.0
  %647 = vmatpush2.msra.mxu0 0.0
  %648 = vmatprep.subr.mxu0 0.0
  %649 = vmatpush2.msra.mxu0 0.0
  %650 = vmatprep.subr.mxu0 0.0
  %651 = vmatpush2.msra.mxu0 0.0
  %652 = vmatprep.subr.mxu0 0.0
  %653 = vmatpush2.msra.mxu0 0.0
  %654 = vmatprep.subr.mxu0 0.0
  %655 = vmatpush2.msra.mxu0 0.0
  %656 = vmatprep.subr.mxu0 0.0
  %657 = vmatpush2.msra.mxu0 0.0
  %658 = vmatprep.subr.mxu0 0.0
  %659 = vmatpush2.msra.mxu0 0.0
  %660 = vmatprep.subr.mxu0 0.0
  %661 = vmatpush2.msra.mxu0 0.0
  %662 = vmatprep.subr.mxu0 0.0
  %663 = vmatpush2.msra.mxu0 0.0
  %664 = vmatprep.subr.mxu0 0.0
  %665 = vmatpush2.msra.mxu0 0.0
  %666 = vmatprep.mubr.f32.mxu0 0.0
  %667 = vmatmul.mubr.f32.gmra.mxu0 %v596
  %v668 = vpop.f32.mrf.mxu0
  %v669 = vadd.f32 0.0, %v668
  %v670 = vpop.f32.mrf.mxu0
  %v671 = vadd.f32 0.0, %v670
  %672 = vdwg.mxu0
  %v673 = vadd.f32 %v600, %v669
  %v674 = vadd.f32 %v601, %v671
  %v675 = vxor.u32 %v673, 2147483648
  %v676 = vxor.u32 %v674, 2147483648
  %v677 = vmul.f32 %v675, 1.442695
  %v678 = vpow.pop %v677
  %v679 = vmul.f32 %v676, 1.442695
  %v680 = vpow.pop %v679
  %v681 = vadd.f32 %v678, 1.0
  %v682 = vadd.f32 %v680, 1.0
  %v683 = vrcp.pop %v681
  %v684 = vmul.f32 1.0, %v683
  %v685 = vrcp.pop %v682
  %v686 = vmul.f32 1.0, %v685
  %s687 = scalar_lea.vmem %s1, 24
  %v688 = vld [vmem:[%s687] sm:$0xff]
  %v689 = vmul.f32 %v596, %v684
  %690 = vmatprep.subr.mxu0 0.0
  %691 = vmatpush1.msra.mxu0 %v75
  %692 = vmatprep.subr.mxu0 0.0
  %693 = vmatpush1.msra.mxu0 %v74
  %694 = vmatprep.subr.mxu0 0.0
  %695 = vmatpush1.msra.mxu0 %v73
  %696 = vmatprep.subr.mxu0 0.0
  %697 = vmatpush1.msra.mxu0 %v72
  %698 = vmatprep.subr.mxu0 0.0
  %699 = vmatpush1.msra.mxu0 %v71
  %700 = vmatprep.subr.mxu0 0.0
  %701 = vmatpush1.msra.mxu0 %v70
  %702 = vmatprep.subr.mxu0 0.0
  %703 = vmatpush1.msra.mxu0 %v69
  %704 = vmatprep.subr.mxu0 0.0
  %705 = vmatpush1.msra.mxu0 %v68
  %706 = vmatprep.subr.mxu0 0.0
  %707 = vmatpush1.msra.mxu0 %v67
  %708 = vmatprep.subr.mxu0 0.0
  %709 = vmatpush1.msra.mxu0 %v66
  %710 = vmatprep.subr.mxu0 0.0
  %711 = vmatpush1.msra.mxu0 %v65
  %712 = vmatprep.subr.mxu0 0.0
  %713 = vmatpush1.msra.mxu0 %v64
  %714 = vmatprep.subr.mxu0 0.0
  %715 = vmatpush1.msra.mxu0 %v63
  %716 = vmatprep.subr.mxu0 0.0
  %717 = vmatpush1.msra.mxu0 %v62
  %718 = vmatprep.subr.mxu0 0.0
  %719 = vmatpush1.msra.mxu0 %v61
  %720 = vmatprep.subr.mxu0 0.0
  %721 = vmatpush1.msra.mxu0 %v60
  %722 = vmatprep.subr.mxu0 0.0
  %723 = vmatpush2.msra.mxu0 0.0
  %724 = vmatprep.subr.mxu0 0.0
  %725 = vmatpush2.msra.mxu0 0.0
  %726 = vmatprep.subr.mxu0 0.0
  %727 = vmatpush2.msra.mxu0 0.0
  %728 = vmatprep.subr.mxu0 0.0
  %729 = vmatpush2.msra.mxu0 0.0
  %730 = vmatprep.subr.mxu0 0.0
  %731 = vmatpush2.msra.mxu0 0.0
  %732 = vmatprep.subr.mxu0 0.0
  %733 = vmatpush2.msra.mxu0 0.0
  %734 = vmatprep.subr.mxu0 0.0
  %735 = vmatpush2.msra.mxu0 0.0
  %736 = vmatprep.subr.mxu0 0.0
  %737 = vmatpush2.msra.mxu0 0.0
  %738 = vmatprep.subr.mxu0 0.0
  %739 = vmatpush2.msra.mxu0 0.0
  %740 = vmatprep.subr.mxu0 0.0
  %741 = vmatpush2.msra.mxu0 0.0
  %742 = vmatprep.subr.mxu0 0.0
  %743 = vmatpush2.msra.mxu0 0.0
  %744 = vmatprep.subr.mxu0 0.0
  %745 = vmatpush2.msra.mxu0 0.0
  %746 = vmatprep.subr.mxu0 0.0
  %747 = vmatpush2.msra.mxu0 0.0
  %748 = vmatprep.subr.mxu0 0.0
  %749 = vmatpush2.msra.mxu0 0.0
  %750 = vmatprep.subr.mxu0 0.0
  %751 = vmatpush2.msra.mxu0 0.0
  %752 = vmatprep.subr.mxu0 0.0
  %753 = vmatpush2.msra.mxu0 0.0
  %754 = vmatprep.mubr.f32.mxu0 0.0
  %755 = vmatmul.mubr.f32.gmra.mxu0 %v689
  %v756 = vpop.f32.mrf.mxu0
  %v757 = vadd.f32 0.0, %v756
  %v758 = vpop.f32.mrf.mxu0
  %759 = vdwg.mxu0
  %v760 = vadd.f32 %v688, %v757
  %v761 = vtanh.pop %v760
  %v762 = vmul.f32 %v686, %v596
  %v763 = vsub.f32 1.0, %v686
  %v764 = vmul.f32 %v763, %v761
  %v765 = vadd.f32 %v762, %v764
  %s766 = sadd.s32 %s76, 3
  %p767 = scmp.lt.s32.totalorder %s766, 8
  %s768 = scalar_select %p767, 1, 0
  %v769 = vstv %s768
  %vm770 = vcmp.eq.s32.totalorder %v769, 1
  %v771 = vsel %vm770, %v765, %v596
  %s772 = scalar_lea.vmem %s5, 24
  %773 = vst [vmem:[%s772] sm:$0xff] %v771
  %s774 = scalar_lea.vmem %s0, 64
  %v775 = vld [vmem:[%s774] sm:$0xff]
  %v776 = vld [vmem:[%s774 + $0x8] sm:$0xff]
  %777 = vmatprep.subr.mxu0 %v59
  %778 = vmatpush1.msra.mxu0 %v58
  %779 = vmatprep.subr.mxu0 %v57
  %780 = vmatpush1.msra.mxu0 %v56
  %781 = vmatprep.subr.mxu0 %v55
  %782 = vmatpush1.msra.mxu0 %v54
  %783 = vmatprep.subr.mxu0 %v53
  %784 = vmatpush1.msra.mxu0 %v52
  %785 = vmatprep.subr.mxu0 %v51
  %786 = vmatpush1.msra.mxu0 %v50
  %787 = vmatprep.subr.mxu0 %v49
  %788 = vmatpush1.msra.mxu0 %v48
  %789 = vmatprep.subr.mxu0 %v47
  %790 = vmatpush1.msra.mxu0 %v46
  %791 = vmatprep.subr.mxu0 %v45
  %792 = vmatpush1.msra.mxu0 %v44
  %793 = vmatprep.subr.mxu0 %v43
  %794 = vmatpush1.msra.mxu0 %v42
  %795 = vmatprep.subr.mxu0 %v41
  %796 = vmatpush1.msra.mxu0 %v40
  %797 = vmatprep.subr.mxu0 %v39
  %798 = vmatpush1.msra.mxu0 %v38
  %799 = vmatprep.subr.mxu0 %v37
  %800 = vmatpush1.msra.mxu0 %v36
  %801 = vmatprep.subr.mxu0 %v35
  %802 = vmatpush1.msra.mxu0 %v34
  %803 = vmatprep.subr.mxu0 %v33
  %804 = vmatpush1.msra.mxu0 %v32
  %805 = vmatprep.subr.mxu0 %v31
  %806 = vmatpush1.msra.mxu0 %v30
  %807 = vmatprep.subr.mxu0 %v29
  %808 = vmatpush1.msra.mxu0 %v28
  %809 = vmatprep.subr.mxu0 0.0
  %810 = vmatpush2.msra.mxu0 0.0
  %811 = vmatprep.subr.mxu0 0.0
  %812 = vmatpush2.msra.mxu0 0.0
  %813 = vmatprep.subr.mxu0 0.0
  %814 = vmatpush2.msra.mxu0 0.0
  %815 = vmatprep.subr.mxu0 0.0
  %816 = vmatpush2.msra.mxu0 0.0
  %817 = vmatprep.subr.mxu0 0.0
  %818 = vmatpush2.msra.mxu0 0.0
  %819 = vmatprep.subr.mxu0 0.0
  %820 = vmatpush2.msra.mxu0 0.0
  %821 = vmatprep.subr.mxu0 0.0
  %822 = vmatpush2.msra.mxu0 0.0
  %823 = vmatprep.subr.mxu0 0.0
  %824 = vmatpush2.msra.mxu0 0.0
  %825 = vmatprep.subr.mxu0 0.0
  %826 = vmatpush2.msra.mxu0 0.0
  %827 = vmatprep.subr.mxu0 0.0
  %828 = vmatpush2.msra.mxu0 0.0
  %829 = vmatprep.subr.mxu0 0.0
  %830 = vmatpush2.msra.mxu0 0.0
  %831 = vmatprep.subr.mxu0 0.0
  %832 = vmatpush2.msra.mxu0 0.0
  %833 = vmatprep.subr.mxu0 0.0
  %834 = vmatpush2.msra.mxu0 0.0
  %835 = vmatprep.subr.mxu0 0.0
  %836 = vmatpush2.msra.mxu0 0.0
  %837 = vmatprep.subr.mxu0 0.0
  %838 = vmatpush2.msra.mxu0 0.0
  %839 = vmatprep.subr.mxu0 0.0
  %840 = vmatpush2.msra.mxu0 0.0
  %841 = vmatprep.mubr.f32.mxu0 0.0
  %842 = vmatmul.mubr.f32.gmra.mxu0 %v771
  %v843 = vpop.f32.mrf.mxu0
  %v844 = vadd.f32 0.0, %v843
  %v845 = vpop.f32.mrf.mxu0
  %v846 = vadd.f32 0.0, %v845
  %847 = vdwg.mxu0
  %v848 = vadd.f32 %v775, %v844
  %v849 = vadd.f32 %v776, %v846
  %v850 = vxor.u32 %v848, 2147483648
  %v851 = vxor.u32 %v849, 2147483648
  %v852 = vmul.f32 %v850, 1.442695
  %v853 = vpow.pop %v852
  %v854 = vmul.f32 %v851, 1.442695
  %v855 = vpow.pop %v854
  %v856 = vadd.f32 %v853, 1.0
  %v857 = vadd.f32 %v855, 1.0
  %v858 = vrcp.pop %v856
  %v859 = vmul.f32 1.0, %v858
  %v860 = vrcp.pop %v857
  %v861 = vmul.f32 1.0, %v860
  %s862 = scalar_lea.vmem %s1, 32
  %v863 = vld [vmem:[%s862] sm:$0xff]
  %v864 = vmul.f32 %v771, %v859
  %865 = vmatprep.subr.mxu0 0.0
  %866 = vmatpush1.msra.mxu0 %v75
  %867 = vmatprep.subr.mxu0 0.0
  %868 = vmatpush1.msra.mxu0 %v74
  %869 = vmatprep.subr.mxu0 0.0
  %870 = vmatpush1.msra.mxu0 %v73
  %871 = vmatprep.subr.mxu0 0.0
  %872 = vmatpush1.msra.mxu0 %v72
  %873 = vmatprep.subr.mxu0 0.0
  %874 = vmatpush1.msra.mxu0 %v71
  %875 = vmatprep.subr.mxu0 0.0
  %876 = vmatpush1.msra.mxu0 %v70
  %877 = vmatprep.subr.mxu0 0.0
  %878 = vmatpush1.msra.mxu0 %v69
  %879 = vmatprep.subr.mxu0 0.0
  %880 = vmatpush1.msra.mxu0 %v68
  %881 = vmatprep.subr.mxu0 0.0
  %882 = vmatpush1.msra.mxu0 %v67
  %883 = vmatprep.subr.mxu0 0.0
  %884 = vmatpush1.msra.mxu0 %v66
  %885 = vmatprep.subr.mxu0 0.0
  %886 = vmatpush1.msra.mxu0 %v65
  %887 = vmatprep.subr.mxu0 0.0
  %888 = vmatpush1.msra.mxu0 %v64
  %889 = vmatprep.subr.mxu0 0.0
  %890 = vmatpush1.msra.mxu0 %v63
  %891 = vmatprep.subr.mxu0 0.0
  %892 = vmatpush1.msra.mxu0 %v62
  %893 = vmatprep.subr.mxu0 0.0
  %894 = vmatpush1.msra.mxu0 %v61
  %895 = vmatprep.subr.mxu0 0.0
  %896 = vmatpush1.msra.mxu0 %v60
  %897 = vmatprep.subr.mxu0 0.0
  %898 = vmatpush2.msra.mxu0 0.0
  %899 = vmatprep.subr.mxu0 0.0
  %900 = vmatpush2.msra.mxu0 0.0
  %901 = vmatprep.subr.mxu0 0.0
  %902 = vmatpush2.msra.mxu0 0.0
  %903 = vmatprep.subr.mxu0 0.0
  %904 = vmatpush2.msra.mxu0 0.0
  %905 = vmatprep.subr.mxu0 0.0
  %906 = vmatpush2.msra.mxu0 0.0
  %907 = vmatprep.subr.mxu0 0.0
  %908 = vmatpush2.msra.mxu0 0.0
  %909 = vmatprep.subr.mxu0 0.0
  %910 = vmatpush2.msra.mxu0 0.0
  %911 = vmatprep.subr.mxu0 0.0
  %912 = vmatpush2.msra.mxu0 0.0
  %913 = vmatprep.subr.mxu0 0.0
  %914 = vmatpush2.msra.mxu0 0.0
  %915 = vmatprep.subr.mxu0 0.0
  %916 = vmatpush2.msra.mxu0 0.0
  %917 = vmatprep.subr.mxu0 0.0
  %918 = vmatpush2.msra.mxu0 0.0
  %919 = vmatprep.subr.mxu0 0.0
  %920 = vmatpush2.msra.mxu0 0.0
  %921 = vmatprep.subr.mxu0 0.0
  %922 = vmatpush2.msra.mxu0 0.0
  %923 = vmatprep.subr.mxu0 0.0
  %924 = vmatpush2.msra.mxu0 0.0
  %925 = vmatprep.subr.mxu0 0.0
  %926 = vmatpush2.msra.mxu0 0.0
  %927 = vmatprep.subr.mxu0 0.0
  %928 = vmatpush2.msra.mxu0 0.0
  %929 = vmatprep.mubr.f32.mxu0 0.0
  %930 = vmatmul.mubr.f32.gmra.mxu0 %v864
  %v931 = vpop.f32.mrf.mxu0
  %v932 = vadd.f32 0.0, %v931
  %v933 = vpop.f32.mrf.mxu0
  %934 = vdwg.mxu0
  %v935 = vadd.f32 %v863, %v932
  %v936 = vtanh.pop %v935
  %v937 = vmul.f32 %v861, %v771
  %v938 = vsub.f32 1.0, %v861
  %v939 = vmul.f32 %v938, %v936
  %v940 = vadd.f32 %v937, %v939
  %s941 = sadd.s32 %s76, 4
  %p942 = scmp.lt.s32.totalorder %s941, 8
  %s943 = scalar_select %p942, 1, 0
  %v944 = vstv %s943
  %vm945 = vcmp.eq.s32.totalorder %v944, 1
  %v946 = vsel %vm945, %v940, %v771
  %s947 = scalar_lea.vmem %s5, 32
  %948 = vst [vmem:[%s947] sm:$0xff] %v946
  %s949 = scalar_lea.vmem %s0, 80
  %v950 = vld [vmem:[%s949] sm:$0xff]
  %v951 = vld [vmem:[%s949 + $0x8] sm:$0xff]
  %952 = vmatprep.subr.mxu0 %v59
  %953 = vmatpush1.msra.mxu0 %v58
  %954 = vmatprep.subr.mxu0 %v57
  %955 = vmatpush1.msra.mxu0 %v56
  %956 = vmatprep.subr.mxu0 %v55
  %957 = vmatpush1.msra.mxu0 %v54
  %958 = vmatprep.subr.mxu0 %v53
  %959 = vmatpush1.msra.mxu0 %v52
  %960 = vmatprep.subr.mxu0 %v51
  %961 = vmatpush1.msra.mxu0 %v50
  %962 = vmatprep.subr.mxu0 %v49
  %963 = vmatpush1.msra.mxu0 %v48
  %964 = vmatprep.subr.mxu0 %v47
  %965 = vmatpush1.msra.mxu0 %v46
  %966 = vmatprep.subr.mxu0 %v45
  %967 = vmatpush1.msra.mxu0 %v44
  %968 = vmatprep.subr.mxu0 %v43
  %969 = vmatpush1.msra.mxu0 %v42
  %970 = vmatprep.subr.mxu0 %v41
  %971 = vmatpush1.msra.mxu0 %v40
  %972 = vmatprep.subr.mxu0 %v39
  %973 = vmatpush1.msra.mxu0 %v38
  %974 = vmatprep.subr.mxu0 %v37
  %975 = vmatpush1.msra.mxu0 %v36
  %976 = vmatprep.subr.mxu0 %v35
  %977 = vmatpush1.msra.mxu0 %v34
  %978 = vmatprep.subr.mxu0 %v33
  %979 = vmatpush1.msra.mxu0 %v32
  %980 = vmatprep.subr.mxu0 %v31
  %981 = vmatpush1.msra.mxu0 %v30
  %982 = vmatprep.subr.mxu0 %v29
  %983 = vmatpush1.msra.mxu0 %v28
  %984 = vmatprep.subr.mxu0 0.0
  %985 = vmatpush2.msra.mxu0 0.0
  %986 = vmatprep.subr.mxu0 0.0
  %987 = vmatpush2.msra.mxu0 0.0
  %988 = vmatprep.subr.mxu0 0.0
  %989 = vmatpush2.msra.mxu0 0.0
  %990 = vmatprep.subr.mxu0 0.0
  %991 = vmatpush2.msra.mxu0 0.0
  %992 = vmatprep.subr.mxu0 0.0
  %993 = vmatpush2.msra.mxu0 0.0
  %994 = vmatprep.subr.mxu0 0.0
  %995 = vmatpush2.msra.mxu0 0.0
  %996 = vmatprep.subr.mxu0 0.0
  %997 = vmatpush2.msra.mxu0 0.0
  %998 = vmatprep.subr.mxu0 0.0
  %999 = vmatpush2.msra.mxu0 0.0
  %1000 = vmatprep.subr.mxu0 0.0
  %1001 = vmatpush2.msra.mxu0 0.0
  %1002 = vmatprep.subr.mxu0 0.0
  %1003 = vmatpush2.msra.mxu0 0.0
  %1004 = vmatprep.subr.mxu0 0.0
  %1005 = vmatpush2.msra.mxu0 0.0
  %1006 = vmatprep.subr.mxu0 0.0
  %1007 = vmatpush2.msra.mxu0 0.0
  %1008 = vmatprep.subr.mxu0 0.0
  %1009 = vmatpush2.msra.mxu0 0.0
  %1010 = vmatprep.subr.mxu0 0.0
  %1011 = vmatpush2.msra.mxu0 0.0
  %1012 = vmatprep.subr.mxu0 0.0
  %1013 = vmatpush2.msra.mxu0 0.0
  %1014 = vmatprep.subr.mxu0 0.0
  %1015 = vmatpush2.msra.mxu0 0.0
  %1016 = vmatprep.mubr.f32.mxu0 0.0
  %1017 = vmatmul.mubr.f32.gmra.mxu0 %v946
  %v1018 = vpop.f32.mrf.mxu0
  %v1019 = vadd.f32 0.0, %v1018
  %v1020 = vpop.f32.mrf.mxu0
  %v1021 = vadd.f32 0.0, %v1020
  %1022 = vdwg.mxu0
  %v1023 = vadd.f32 %v950, %v1019
  %v1024 = vadd.f32 %v951, %v1021
  %v1025 = vxor.u32 %v1023, 2147483648
  %v1026 = vxor.u32 %v1024, 2147483648
  %v1027 = vmul.f32 %v1025, 1.442695
  %v1028 = vpow.pop %v1027
  %v1029 = vmul.f32 %v1026, 1.442695
  %v1030 = vpow.pop %v1029
  %v1031 = vadd.f32 %v1028, 1.0
  %v1032 = vadd.f32 %v1030, 1.0
  %v1033 = vrcp.pop %v1031
  %v1034 = vmul.f32 1.0, %v1033
  %v1035 = vrcp.pop %v1032
  %v1036 = vmul.f32 1.0, %v1035
  %s1037 = scalar_lea.vmem %s1, 40
  %v1038 = vld [vmem:[%s1037] sm:$0xff]
  %v1039 = vmul.f32 %v946, %v1034
  %1040 = vmatprep.subr.mxu0 0.0
  %1041 = vmatpush1.msra.mxu0 %v75
  %1042 = vmatprep.subr.mxu0 0.0
  %1043 = vmatpush1.msra.mxu0 %v74
  %1044 = vmatprep.subr.mxu0 0.0
  %1045 = vmatpush1.msra.mxu0 %v73
  %1046 = vmatprep.subr.mxu0 0.0
  %1047 = vmatpush1.msra.mxu0 %v72
  %1048 = vmatprep.subr.mxu0 0.0
  %1049 = vmatpush1.msra.mxu0 %v71
  %1050 = vmatprep.subr.mxu0 0.0
  %1051 = vmatpush1.msra.mxu0 %v70
  %1052 = vmatprep.subr.mxu0 0.0
  %1053 = vmatpush1.msra.mxu0 %v69
  %1054 = vmatprep.subr.mxu0 0.0
  %1055 = vmatpush1.msra.mxu0 %v68
  %1056 = vmatprep.subr.mxu0 0.0
  %1057 = vmatpush1.msra.mxu0 %v67
  %1058 = vmatprep.subr.mxu0 0.0
  %1059 = vmatpush1.msra.mxu0 %v66
  %1060 = vmatprep.subr.mxu0 0.0
  %1061 = vmatpush1.msra.mxu0 %v65
  %1062 = vmatprep.subr.mxu0 0.0
  %1063 = vmatpush1.msra.mxu0 %v64
  %1064 = vmatprep.subr.mxu0 0.0
  %1065 = vmatpush1.msra.mxu0 %v63
  %1066 = vmatprep.subr.mxu0 0.0
  %1067 = vmatpush1.msra.mxu0 %v62
  %1068 = vmatprep.subr.mxu0 0.0
  %1069 = vmatpush1.msra.mxu0 %v61
  %1070 = vmatprep.subr.mxu0 0.0
  %1071 = vmatpush1.msra.mxu0 %v60
  %1072 = vmatprep.subr.mxu0 0.0
  %1073 = vmatpush2.msra.mxu0 0.0
  %1074 = vmatprep.subr.mxu0 0.0
  %1075 = vmatpush2.msra.mxu0 0.0
  %1076 = vmatprep.subr.mxu0 0.0
  %1077 = vmatpush2.msra.mxu0 0.0
  %1078 = vmatprep.subr.mxu0 0.0
  %1079 = vmatpush2.msra.mxu0 0.0
  %1080 = vmatprep.subr.mxu0 0.0
  %1081 = vmatpush2.msra.mxu0 0.0
  %1082 = vmatprep.subr.mxu0 0.0
  %1083 = vmatpush2.msra.mxu0 0.0
  %1084 = vmatprep.subr.mxu0 0.0
  %1085 = vmatpush2.msra.mxu0 0.0
  %1086 = vmatprep.subr.mxu0 0.0
  %1087 = vmatpush2.msra.mxu0 0.0
  %1088 = vmatprep.subr.mxu0 0.0
  %1089 = vmatpush2.msra.mxu0 0.0
  %1090 = vmatprep.subr.mxu0 0.0
  %1091 = vmatpush2.msra.mxu0 0.0
  %1092 = vmatprep.subr.mxu0 0.0
  %1093 = vmatpush2.msra.mxu0 0.0
  %1094 = vmatprep.subr.mxu0 0.0
  %1095 = vmatpush2.msra.mxu0 0.0
  %1096 = vmatprep.subr.mxu0 0.0
  %1097 = vmatpush2.msra.mxu0 0.0
  %1098 = vmatprep.subr.mxu0 0.0
  %1099 = vmatpush2.msra.mxu0 0.0
  %1100 = vmatprep.subr.mxu0 0.0
  %1101 = vmatpush2.msra.mxu0 0.0
  %1102 = vmatprep.subr.mxu0 0.0
  %1103 = vmatpush2.msra.mxu0 0.0
  %1104 = vmatprep.mubr.f32.mxu0 0.0
  %1105 = vmatmul.mubr.f32.gmra.mxu0 %v1039
  %v1106 = vpop.f32.mrf.mxu0
  %v1107 = vadd.f32 0.0, %v1106
  %v1108 = vpop.f32.mrf.mxu0
  %1109 = vdwg.mxu0
  %v1110 = vadd.f32 %v1038, %v1107
  %v1111 = vtanh.pop %v1110
  %v1112 = vmul.f32 %v1036, %v946
  %v1113 = vsub.f32 1.0, %v1036
  %v1114 = vmul.f32 %v1113, %v1111
  %v1115 = vadd.f32 %v1112, %v1114
  %s1116 = sadd.s32 %s76, 5
  %p1117 = scmp.lt.s32.totalorder %s1116, 8
  %s1118 = scalar_select %p1117, 1, 0
  %v1119 = vstv %s1118
  %vm1120 = vcmp.eq.s32.totalorder %v1119, 1
  %v1121 = vsel %vm1120, %v1115, %v946
  %s1122 = scalar_lea.vmem %s5, 40
  %1123 = vst [vmem:[%s1122] sm:$0xff] %v1121
  %s1124 = scalar_lea.vmem %s0, 96
  %v1125 = vld [vmem:[%s1124] sm:$0xff]
  %v1126 = vld [vmem:[%s1124 + $0x8] sm:$0xff]
  %1127 = vmatprep.subr.mxu0 %v59
  %1128 = vmatpush1.msra.mxu0 %v58
  %1129 = vmatprep.subr.mxu0 %v57
  %1130 = vmatpush1.msra.mxu0 %v56
  %1131 = vmatprep.subr.mxu0 %v55
  %1132 = vmatpush1.msra.mxu0 %v54
  %1133 = vmatprep.subr.mxu0 %v53
  %1134 = vmatpush1.msra.mxu0 %v52
  %1135 = vmatprep.subr.mxu0 %v51
  %1136 = vmatpush1.msra.mxu0 %v50
  %1137 = vmatprep.subr.mxu0 %v49
  %1138 = vmatpush1.msra.mxu0 %v48
  %1139 = vmatprep.subr.mxu0 %v47
  %1140 = vmatpush1.msra.mxu0 %v46
  %1141 = vmatprep.subr.mxu0 %v45
  %1142 = vmatpush1.msra.mxu0 %v44
  %1143 = vmatprep.subr.mxu0 %v43
  %1144 = vmatpush1.msra.mxu0 %v42
  %1145 = vmatprep.subr.mxu0 %v41
  %1146 = vmatpush1.msra.mxu0 %v40
  %1147 = vmatprep.subr.mxu0 %v39
  %1148 = vmatpush1.msra.mxu0 %v38
  %1149 = vmatprep.subr.mxu0 %v37
  %1150 = vmatpush1.msra.mxu0 %v36
  %1151 = vmatprep.subr.mxu0 %v35
  %1152 = vmatpush1.msra.mxu0 %v34
  %1153 = vmatprep.subr.mxu0 %v33
  %1154 = vmatpush1.msra.mxu0 %v32
  %1155 = vmatprep.subr.mxu0 %v31
  %1156 = vmatpush1.msra.mxu0 %v30
  %1157 = vmatprep.subr.mxu0 %v29
  %1158 = vmatpush1.msra.mxu0 %v28
  %1159 = vmatprep.subr.mxu0 0.0
  %1160 = vmatpush2.msra.mxu0 0.0
  %1161 = vmatprep.subr.mxu0 0.0
  %1162 = vmatpush2.msra.mxu0 0.0
  %1163 = vmatprep.subr.mxu0 0.0
  %1164 = vmatpush2.msra.mxu0 0.0
  %1165 = vmatprep.subr.mxu0 0.0
  %1166 = vmatpush2.msra.mxu0 0.0
  %1167 = vmatprep.subr.mxu0 0.0
  %1168 = vmatpush2.msra.mxu0 0.0
  %1169 = vmatprep.subr.mxu0 0.0
  %1170 = vmatpush2.msra.mxu0 0.0
  %1171 = vmatprep.subr.mxu0 0.0
  %1172 = vmatpush2.msra.mxu0 0.0
  %1173 = vmatprep.subr.mxu0 0.0
  %1174 = vmatpush2.msra.mxu0 0.0
  %1175 = vmatprep.subr.mxu0 0.0
  %1176 = vmatpush2.msra.mxu0 0.0
  %1177 = vmatprep.subr.mxu0 0.0
  %1178 = vmatpush2.msra.mxu0 0.0
  %1179 = vmatprep.subr.mxu0 0.0
  %1180 = vmatpush2.msra.mxu0 0.0
  %1181 = vmatprep.subr.mxu0 0.0
  %1182 = vmatpush2.msra.mxu0 0.0
  %1183 = vmatprep.subr.mxu0 0.0
  %1184 = vmatpush2.msra.mxu0 0.0
  %1185 = vmatprep.subr.mxu0 0.0
  %1186 = vmatpush2.msra.mxu0 0.0
  %1187 = vmatprep.subr.mxu0 0.0
  %1188 = vmatpush2.msra.mxu0 0.0
  %1189 = vmatprep.subr.mxu0 0.0
  %1190 = vmatpush2.msra.mxu0 0.0
  %1191 = vmatprep.mubr.f32.mxu0 0.0
  %1192 = vmatmul.mubr.f32.gmra.mxu0 %v1121
  %v1193 = vpop.f32.mrf.mxu0
  %v1194 = vadd.f32 0.0, %v1193
  %v1195 = vpop.f32.mrf.mxu0
  %v1196 = vadd.f32 0.0, %v1195
  %1197 = vdwg.mxu0
  %v1198 = vadd.f32 %v1125, %v1194
  %v1199 = vadd.f32 %v1126, %v1196
  %v1200 = vxor.u32 %v1198, 2147483648
  %v1201 = vxor.u32 %v1199, 2147483648
  %v1202 = vmul.f32 %v1200, 1.442695
  %v1203 = vpow.pop %v1202
  %v1204 = vmul.f32 %v1201, 1.442695
  %v1205 = vpow.pop %v1204
  %v1206 = vadd.f32 %v1203, 1.0
  %v1207 = vadd.f32 %v1205, 1.0
  %v1208 = vrcp.pop %v1206
  %v1209 = vmul.f32 1.0, %v1208
  %v1210 = vrcp.pop %v1207
  %v1211 = vmul.f32 1.0, %v1210
  %s1212 = scalar_lea.vmem %s1, 48
  %v1213 = vld [vmem:[%s1212] sm:$0xff]
  %v1214 = vmul.f32 %v1121, %v1209
  %1215 = vmatprep.subr.mxu0 0.0
  %1216 = vmatpush1.msra.mxu0 %v75
  %1217 = vmatprep.subr.mxu0 0.0
  %1218 = vmatpush1.msra.mxu0 %v74
  %1219 = vmatprep.subr.mxu0 0.0
  %1220 = vmatpush1.msra.mxu0 %v73
  %1221 = vmatprep.subr.mxu0 0.0
  %1222 = vmatpush1.msra.mxu0 %v72
  %1223 = vmatprep.subr.mxu0 0.0
  %1224 = vmatpush1.msra.mxu0 %v71
  %1225 = vmatprep.subr.mxu0 0.0
  %1226 = vmatpush1.msra.mxu0 %v70
  %1227 = vmatprep.subr.mxu0 0.0
  %1228 = vmatpush1.msra.mxu0 %v69
  %1229 = vmatprep.subr.mxu0 0.0
  %1230 = vmatpush1.msra.mxu0 %v68
  %1231 = vmatprep.subr.mxu0 0.0
  %1232 = vmatpush1.msra.mxu0 %v67
  %1233 = vmatprep.subr.mxu0 0.0
  %1234 = vmatpush1.msra.mxu0 %v66
  %1235 = vmatprep.subr.mxu0 0.0
  %1236 = vmatpush1.msra.mxu0 %v65
  %1237 = vmatprep.subr.mxu0 0.0
  %1238 = vmatpush1.msra.mxu0 %v64
  %1239 = vmatprep.subr.mxu0 0.0
  %1240 = vmatpush1.msra.mxu0 %v63
  %1241 = vmatprep.subr.mxu0 0.0
  %1242 = vmatpush1.msra.mxu0 %v62
  %1243 = vmatprep.subr.mxu0 0.0
  %1244 = vmatpush1.msra.mxu0 %v61
  %1245 = vmatprep.subr.mxu0 0.0
  %1246 = vmatpush1.msra.mxu0 %v60
  %1247 = vmatprep.subr.mxu0 0.0
  %1248 = vmatpush2.msra.mxu0 0.0
  %1249 = vmatprep.subr.mxu0 0.0
  %1250 = vmatpush2.msra.mxu0 0.0
  %1251 = vmatprep.subr.mxu0 0.0
  %1252 = vmatpush2.msra.mxu0 0.0
  %1253 = vmatprep.subr.mxu0 0.0
  %1254 = vmatpush2.msra.mxu0 0.0
  %1255 = vmatprep.subr.mxu0 0.0
  %1256 = vmatpush2.msra.mxu0 0.0
  %1257 = vmatprep.subr.mxu0 0.0
  %1258 = vmatpush2.msra.mxu0 0.0
  %1259 = vmatprep.subr.mxu0 0.0
  %1260 = vmatpush2.msra.mxu0 0.0
  %1261 = vmatprep.subr.mxu0 0.0
  %1262 = vmatpush2.msra.mxu0 0.0
  %1263 = vmatprep.subr.mxu0 0.0
  %1264 = vmatpush2.msra.mxu0 0.0
  %1265 = vmatprep.subr.mxu0 0.0
  %1266 = vmatpush2.msra.mxu0 0.0
  %1267 = vmatprep.subr.mxu0 0.0
  %1268 = vmatpush2.msra.mxu0 0.0
  %1269 = vmatprep.subr.mxu0 0.0
  %1270 = vmatpush2.msra.mxu0 0.0
  %1271 = vmatprep.subr.mxu0 0.0
  %1272 = vmatpush2.msra.mxu0 0.0
  %1273 = vmatprep.subr.mxu0 0.0
  %1274 = vmatpush2.msra.mxu0 0.0
  %1275 = vmatprep.subr.mxu0 0.0
  %1276 = vmatpush2.msra.mxu0 0.0
  %1277 = vmatprep.subr.mxu0 0.0
  %1278 = vmatpush2.msra.mxu0 0.0
  %1279 = vmatprep.mubr.f32.mxu0 0.0
  %1280 = vmatmul.mubr.f32.gmra.mxu0 %v1214
  %v1281 = vpop.f32.mrf.mxu0
  %v1282 = vadd.f32 0.0, %v1281
  %v1283 = vpop.f32.mrf.mxu0
  %1284 = vdwg.mxu0
  %v1285 = vadd.f32 %v1213, %v1282
  %v1286 = vtanh.pop %v1285
  %v1287 = vmul.f32 %v1211, %v1121
  %v1288 = vsub.f32 1.0, %v1211
  %v1289 = vmul.f32 %v1288, %v1286
  %v1290 = vadd.f32 %v1287, %v1289
  %s1291 = sadd.s32 %s76, 6
  %p1292 = scmp.lt.s32.totalorder %s1291, 8
  %s1293 = scalar_select %p1292, 1, 0
  %v1294 = vstv %s1293
  %vm1295 = vcmp.eq.s32.totalorder %v1294, 1
  %v1296 = vsel %vm1295, %v1290, %v1121
  %s1297 = scalar_lea.vmem %s5, 48
  %1298 = vst [vmem:[%s1297] sm:$0xff] %v1296
  %s1299 = scalar_lea.vmem %s0, 112
  %v1300 = vld [vmem:[%s1299] sm:$0xff]
  %v1301 = vld [vmem:[%s1299 + $0x8] sm:$0xff]
  %1302 = vmatprep.subr.mxu0 %v59
  %1303 = vmatpush1.msra.mxu0 %v58
  %1304 = vmatprep.subr.mxu0 %v57
  %1305 = vmatpush1.msra.mxu0 %v56
  %1306 = vmatprep.subr.mxu0 %v55
  %1307 = vmatpush1.msra.mxu0 %v54
  %1308 = vmatprep.subr.mxu0 %v53
  %1309 = vmatpush1.msra.mxu0 %v52
  %1310 = vmatprep.subr.mxu0 %v51
  %1311 = vmatpush1.msra.mxu0 %v50
  %1312 = vmatprep.subr.mxu0 %v49
  %1313 = vmatpush1.msra.mxu0 %v48
  %1314 = vmatprep.subr.mxu0 %v47
  %1315 = vmatpush1.msra.mxu0 %v46
  %1316 = vmatprep.subr.mxu0 %v45
  %1317 = vmatpush1.msra.mxu0 %v44
  %1318 = vmatprep.subr.mxu0 %v43
  %1319 = vmatpush1.msra.mxu0 %v42
  %1320 = vmatprep.subr.mxu0 %v41
  %1321 = vmatpush1.msra.mxu0 %v40
  %1322 = vmatprep.subr.mxu0 %v39
  %1323 = vmatpush1.msra.mxu0 %v38
  %1324 = vmatprep.subr.mxu0 %v37
  %1325 = vmatpush1.msra.mxu0 %v36
  %1326 = vmatprep.subr.mxu0 %v35
  %1327 = vmatpush1.msra.mxu0 %v34
  %1328 = vmatprep.subr.mxu0 %v33
  %1329 = vmatpush1.msra.mxu0 %v32
  %1330 = vmatprep.subr.mxu0 %v31
  %1331 = vmatpush1.msra.mxu0 %v30
  %1332 = vmatprep.subr.mxu0 %v29
  %1333 = vmatpush1.msra.mxu0 %v28
  %1334 = vmatprep.subr.mxu0 0.0
  %1335 = vmatpush2.msra.mxu0 0.0
  %1336 = vmatprep.subr.mxu0 0.0
  %1337 = vmatpush2.msra.mxu0 0.0
  %1338 = vmatprep.subr.mxu0 0.0
  %1339 = vmatpush2.msra.mxu0 0.0
  %1340 = vmatprep.subr.mxu0 0.0
  %1341 = vmatpush2.msra.mxu0 0.0
  %1342 = vmatprep.subr.mxu0 0.0
  %1343 = vmatpush2.msra.mxu0 0.0
  %1344 = vmatprep.subr.mxu0 0.0
  %1345 = vmatpush2.msra.mxu0 0.0
  %1346 = vmatprep.subr.mxu0 0.0
  %1347 = vmatpush2.msra.mxu0 0.0
  %1348 = vmatprep.subr.mxu0 0.0
  %1349 = vmatpush2.msra.mxu0 0.0
  %1350 = vmatprep.subr.mxu0 0.0
  %1351 = vmatpush2.msra.mxu0 0.0
  %1352 = vmatprep.subr.mxu0 0.0
  %1353 = vmatpush2.msra.mxu0 0.0
  %1354 = vmatprep.subr.mxu0 0.0
  %1355 = vmatpush2.msra.mxu0 0.0
  %1356 = vmatprep.subr.mxu0 0.0
  %1357 = vmatpush2.msra.mxu0 0.0
  %1358 = vmatprep.subr.mxu0 0.0
  %1359 = vmatpush2.msra.mxu0 0.0
  %1360 = vmatprep.subr.mxu0 0.0
  %1361 = vmatpush2.msra.mxu0 0.0
  %1362 = vmatprep.subr.mxu0 0.0
  %1363 = vmatpush2.msra.mxu0 0.0
  %1364 = vmatprep.subr.mxu0 0.0
  %1365 = vmatpush2.msra.mxu0 0.0
  %1366 = vmatprep.mubr.f32.mxu0 0.0
  %1367 = vmatmul.mubr.f32.gmra.mxu0 %v1296
  %v1368 = vpop.f32.mrf.mxu0
  %v1369 = vadd.f32 0.0, %v1368
  %v1370 = vpop.f32.mrf.mxu0
  %v1371 = vadd.f32 0.0, %v1370
  %1372 = vdwg.mxu0
  %v1373 = vadd.f32 %v1300, %v1369
  %v1374 = vadd.f32 %v1301, %v1371
  %v1375 = vxor.u32 %v1373, 2147483648
  %v1376 = vxor.u32 %v1374, 2147483648
  %v1377 = vmul.f32 %v1375, 1.442695
  %v1378 = vpow.pop %v1377
  %v1379 = vmul.f32 %v1376, 1.442695
  %v1380 = vpow.pop %v1379
  %v1381 = vadd.f32 %v1378, 1.0
  %v1382 = vadd.f32 %v1380, 1.0
  %v1383 = vrcp.pop %v1381
  %v1384 = vmul.f32 1.0, %v1383
  %v1385 = vrcp.pop %v1382
  %v1386 = vmul.f32 1.0, %v1385
  %s1387 = scalar_lea.vmem %s1, 56
  %v1388 = vld [vmem:[%s1387] sm:$0xff]
  %v1389 = vmul.f32 %v1296, %v1384
  %1390 = vmatprep.subr.mxu0 0.0
  %1391 = vmatpush1.msra.mxu0 %v75
  %1392 = vmatprep.subr.mxu0 0.0
  %1393 = vmatpush1.msra.mxu0 %v74
  %1394 = vmatprep.subr.mxu0 0.0
  %1395 = vmatpush1.msra.mxu0 %v73
  %1396 = vmatprep.subr.mxu0 0.0
  %1397 = vmatpush1.msra.mxu0 %v72
  %1398 = vmatprep.subr.mxu0 0.0
  %1399 = vmatpush1.msra.mxu0 %v71
  %1400 = vmatprep.subr.mxu0 0.0
  %1401 = vmatpush1.msra.mxu0 %v70
  %1402 = vmatprep.subr.mxu0 0.0
  %1403 = vmatpush1.msra.mxu0 %v69
  %1404 = vmatprep.subr.mxu0 0.0
  %1405 = vmatpush1.msra.mxu0 %v68
  %1406 = vmatprep.subr.mxu0 0.0
  %1407 = vmatpush1.msra.mxu0 %v67
  %1408 = vmatprep.subr.mxu0 0.0
  %1409 = vmatpush1.msra.mxu0 %v66
  %1410 = vmatprep.subr.mxu0 0.0
  %1411 = vmatpush1.msra.mxu0 %v65
  %1412 = vmatprep.subr.mxu0 0.0
  %1413 = vmatpush1.msra.mxu0 %v64
  %1414 = vmatprep.subr.mxu0 0.0
  %1415 = vmatpush1.msra.mxu0 %v63
  %1416 = vmatprep.subr.mxu0 0.0
  %1417 = vmatpush1.msra.mxu0 %v62
  %1418 = vmatprep.subr.mxu0 0.0
  %1419 = vmatpush1.msra.mxu0 %v61
  %1420 = vmatprep.subr.mxu0 0.0
  %1421 = vmatpush1.msra.mxu0 %v60
  %1422 = vmatprep.subr.mxu0 0.0
  %1423 = vmatpush2.msra.mxu0 0.0
  %1424 = vmatprep.subr.mxu0 0.0
  %1425 = vmatpush2.msra.mxu0 0.0
  %1426 = vmatprep.subr.mxu0 0.0
  %1427 = vmatpush2.msra.mxu0 0.0
  %1428 = vmatprep.subr.mxu0 0.0
  %1429 = vmatpush2.msra.mxu0 0.0
  %1430 = vmatprep.subr.mxu0 0.0
  %1431 = vmatpush2.msra.mxu0 0.0
  %1432 = vmatprep.subr.mxu0 0.0
  %1433 = vmatpush2.msra.mxu0 0.0
  %1434 = vmatprep.subr.mxu0 0.0
  %1435 = vmatpush2.msra.mxu0 0.0
  %1436 = vmatprep.subr.mxu0 0.0
  %1437 = vmatpush2.msra.mxu0 0.0
  %1438 = vmatprep.subr.mxu0 0.0
  %1439 = vmatpush2.msra.mxu0 0.0
  %1440 = vmatprep.subr.mxu0 0.0
  %1441 = vmatpush2.msra.mxu0 0.0
  %1442 = vmatprep.subr.mxu0 0.0
  %1443 = vmatpush2.msra.mxu0 0.0
  %1444 = vmatprep.subr.mxu0 0.0
  %1445 = vmatpush2.msra.mxu0 0.0
  %1446 = vmatprep.subr.mxu0 0.0
  %1447 = vmatpush2.msra.mxu0 0.0
  %1448 = vmatprep.subr.mxu0 0.0
  %1449 = vmatpush2.msra.mxu0 0.0
  %1450 = vmatprep.subr.mxu0 0.0
  %1451 = vmatpush2.msra.mxu0 0.0
  %1452 = vmatprep.subr.mxu0 0.0
  %1453 = vmatpush2.msra.mxu0 0.0
  %1454 = vmatprep.mubr.f32.mxu0 0.0
  %1455 = vmatmul.mubr.f32.gmra.mxu0 %v1389
  %v1456 = vpop.f32.mrf.mxu0
  %v1457 = vadd.f32 0.0, %v1456
  %v1458 = vpop.f32.mrf.mxu0
  %1459 = vdwg.mxu0
  %v1460 = vadd.f32 %v1388, %v1457
  %v1461 = vtanh.pop %v1460
  %v1462 = vmul.f32 %v1386, %v1296
  %v1463 = vsub.f32 1.0, %v1386
  %v1464 = vmul.f32 %v1463, %v1461
  %v1465 = vadd.f32 %v1462, %v1464
  %s1466 = sadd.s32 %s76, 7
  %p1467 = scmp.lt.s32.totalorder %s1466, 8
  %s1468 = scalar_select %p1467, 1, 0
  %v1469 = vstv %s1468
  %vm1470 = vcmp.eq.s32.totalorder %v1469, 1
  %v1471 = vsel %vm1470, %v1465, %v1296
  %s1472 = scalar_lea.vmem %s5, 56
  %1473 = vst [vmem:[%s1472] sm:$0xff] %v1471
  %1474 = vst [vmem:[#allocation2] sm:$0xff] %v1471
  // Predicated region
  $region26: #{gru_forward.5} parent=0 // pred_check
    %p1475 = pneg %p22
  $region27: #{gru_forward.5} parent=0 // pred_check_branch
    %1477 = sbr.rel (%p1475) target = $region29
  $region28: #{gru_forward.5} parent=0 // pred_region
    %1478 = vst [vmem:[%s6] sm:$0xff] %v1471
  $region29: #{gru_forward.5} parent=0 // pred_fallthru
    _
  // Predicated region
  $region30: #{gru_forward.5} parent=0 // pred_check
    _
  $region31: #{gru_forward.5} parent=0 // pred_check_branch
    %1480 = sbr.rel (0) target = $region33
  $region32: #{gru_forward.5} parent=0 // pred_region
    _
  $region33: #{gru_forward.5} parent=0 // pred_fallthru
    _
  // Predicated region
  $region34: #{gru_forward.5} parent=0 // pred_check
    _
  $region35: #{gru_forward.5} parent=0 // pred_check_branch
    %1482 = sbr.rel (0) target = $region37
  $region36: #{gru_forward.5} parent=0 // pred_region
    _
  $region37: #{gru_forward.5} parent=0 // pred_fallthru
    _
  // Predicated region
  $region38: #{gru_forward.5} parent=0 // pred_check
    _
  $region39: #{gru_forward.5} parent=0 // pred_check_branch
    %1484 = sbr.rel (0) target = $region41
  $region40: #{gru_forward.5} parent=0 // pred_region
    _
  $region41: #{gru_forward.5} parent=0 // pred_fallthru
    _
  // Predicated region
  $region42: #{gru_forward.5} parent=0 // pred_check
    _
  $region43: #{gru_forward.5} parent=0 // pred_check_branch
    %1486 = sbr.rel (0) target = $region45
  $region44: #{gru_forward.5} parent=0 // pred_region
    _
  $region45: #{gru_forward.5} parent=0 // pred_fallthru
    _

</llo_original>
